<compile_context>
chip_gen: v5e
topology: v5e:2x2
jax: 0.10.0
libtpu: 0.0.40
codegen_flags: <defaults>
</compile_context>

<pallas_src>
import functools

import jax
import jax.numpy as jnp
from jax.experimental import pallas as pl
from jax.experimental.pallas import tpu as pltpu

LEAKY_SLOPE = 0.01  # nn.LeakyReLU default negative_slope


def _leaky_relu(x):
    return jnp.where(x > 0, x, LEAKY_SLOPE * x)


# ----------------------------- kernel ---------------------------------------
def realnvp_kernel(xT_ref, mask_ref,
                   W0_ref, b0_ref, Wh_ref, bh_ref, Wo_ref, bo_ref,
                   out_ref, *, n_blocks, n_hidden):
    z = xT_ref[...]                                 # [D, TB]  batch on lanes
    D, TB = z.shape
    log_det = jnp.zeros((1, TB), jnp.float32)

    for i in reversed(range(n_blocks)):
        m = mask_ref[i]                             # [D, 1]
        one_m = 1.0 - m
        z_masked = m * z                            # [D, TB]

        # fused s/t MLP: rows [0:H) are the s-net, rows [H:2H) are the t-net
        h = jnp.dot(W0_ref[i], z_masked,
                    preferred_element_type=jnp.float32) + b0_ref[i]   # [2H, TB]
        for j in range(n_hidden):
            h = _leaky_relu(h)
            h = jnp.dot(Wh_ref[i, j], h,
                        preferred_element_type=jnp.float32) + bh_ref[i, j]
        h = _leaky_relu(h)
        st = jnp.dot(Wo_ref[i], h,
                     preferred_element_type=jnp.float32) + bo_ref[i]  # [2D, TB]
        s = jnp.tanh(st[:D])                        # [D, TB]  (s half)
        t = st[D:]                                  # [D, TB]  (t half)

        z = one_m * (z - t) * jnp.exp(-s) + z_masked
        log_det = log_det - jnp.sum(one_m * s, axis=0, keepdims=True)  # [1, TB]

    # fused, lane-dense output slab: rows [0:D) = z, row D = log_det
    out_ref[0:D, :] = z
    out_ref[D:D + 1, :] = log_det


# ----------------------------- wrapper ---------------------------------------
def realnvp_forward(x, maskT, fused_params, *, n_blocks, n_hidden, tile_b=256):
    B, D = x.shape
    assert B % tile_b == 0, "batch must be a multiple of tile_b"
    grid = (B // tile_b,)
    xT = x.T                                        # [D, B]

    def const_spec(arr):
        nd = arr.ndim
        # TODO(synk): if the MLP grows, mark these pipeline_mode=pl.Buffered(1)
        # (or stage into scratch) and set vmem_limit_bytes; trivial at H=32.
        return pl.BlockSpec(arr.shape, lambda b, _n=nd: (0,) * _n)

    in_specs = [pl.BlockSpec((D, tile_b), lambda b: (0, b)),  # batch-tiled x^T
                const_spec(maskT)]
    in_specs += [const_spec(a) for a in fused_params]
    out_specs = pl.BlockSpec((D + 1, tile_b), lambda b: (0, b))
    out_shape = jax.ShapeDtypeStruct((D + 1, B), jnp.float32)

    kernel = functools.partial(realnvp_kernel,
                               n_blocks=n_blocks, n_hidden=n_hidden)
    outT = pl.pallas_call(
        kernel,
        grid=grid,
        in_specs=in_specs,
        out_specs=out_specs,
        out_shape=out_shape,
        compiler_params=pltpu.CompilerParams(
            dimension_semantics=("parallel",)),   # shards across TCs on v7x
    )(xT, maskT, *fused_params)
    return outT[:D].T, outT[D]


# ----------------------------- parameter setup --------------------------------
def _linear_init(key, fan_in, fan_out):
    # torch.nn.Linear default: U(-1/sqrt(fan_in), 1/sqrt(fan_in)); W is [out, in]
    kw, kb = jax.random.split(key)
    bound = 1.0 / (fan_in ** 0.5)
    W = jax.random.uniform(kw, (fan_out, fan_in), jnp.float32, -bound, bound)
    b = jax.random.uniform(kb, (fan_out,), jnp.float32, -bound, bound)
    return W, b


def _mlp_init(key, D, H, n_hidden):
    ks = jax.random.split(key, n_hidden + 2)
    W0, b0 = _linear_init(ks[0], D, H)
    Wh, bh = [], []
    for j in range(n_hidden):
        Wj, bj = _linear_init(ks[1 + j], H, H)
        Wh.append(Wj)
        bh.append(bj)
    Wo, bo = _linear_init(ks[-1], H, D)
    return dict(W0=W0, b0=b0, Wh=Wh, bh=bh, Wo=Wo, bo=bo)


def _block_diag(A, B):
    m, k = A.shape
    p, q = B.shape
    out = jnp.zeros((m + p, k + q), A.dtype)
    out = out.at[:m, :k].set(A)
    out = out.at[m:, k:].set(B)
    return out


def build_params(key, n_blocks, n_hidden, D, H):
    """Per-block torch-layout params (for the reference) + fused kernel arrays."""
    raw_s, raw_t = [], []
    W0f, b0f, Whf, bhf, Wof, bof = [], [], [], [], [], []
    keys = jax.random.split(key, 2 * n_blocks)
    for i in range(n_blocks):
        sp = _mlp_init(keys[2 * i], D, H, n_hidden)
        tp = _mlp_init(keys[2 * i + 1], D, H, n_hidden)
        raw_s.append(sp)
        raw_t.append(tp)
        W0f.append(jnp.concatenate([sp["W0"], tp["W0"]], axis=0))          # [2H, D]
        b0f.append(jnp.concatenate([sp["b0"], tp["b0"]])[:, None])         # [2H, 1]
        Wh_i = [_block_diag(sp["Wh"][j], tp["Wh"][j]) for j in range(n_hidden)]
        bh_i = [jnp.concatenate([sp["bh"][j], tp["bh"][j]])[:, None]
                for j in range(n_hidden)]
        Whf.append(jnp.stack(Wh_i))                                        # [NH, 2H, 2H]
        bhf.append(jnp.stack(bh_i))                                        # [NH, 2H, 1]
        Wof.append(_block_diag(sp["Wo"], tp["Wo"]))                        # [2D, 2H]
        bof.append(jnp.concatenate([sp["bo"], tp["bo"]])[:, None])         # [2D, 1]
    fused = (jnp.stack(W0f), jnp.stack(b0f), jnp.stack(Whf),
             jnp.stack(bhf), jnp.stack(Wof), jnp.stack(bof))
    return raw_s, raw_t, fused


def build_mask(n_blocks, input_size):
    mask = (jnp.arange(input_size) % 2).astype(jnp.float32)
    i_mask = 1.0 - mask
    return jnp.tile(jnp.stack([mask, i_mask]), (n_blocks // 2, 1))         # [NB, D]


# ----------------------------- pure-JAX reference ------------------------------
def realnvp_reference(x, mask, raw_s, raw_t, n_blocks, n_hidden):
    def mlp(h, p, tanh_out):
        h = h @ p["W0"].T + p["b0"]
        for j in range(n_hidden):
            h = jnp.where(h > 0, h, LEAKY_SLOPE * h)
            h = h @ p["Wh"][j].T + p["bh"][j]
        h = jnp.where(h > 0, h, LEAKY_SLOPE * h)
        h = h @ p["Wo"].T + p["bo"]
        return jnp.tanh(h) if tanh_out else h

    z = x
    log_det = jnp.zeros(x.shape[0], jnp.float32)
    for i in reversed(range(n_blocks)):
        m = mask[i]
        z_ = m * z
        s = mlp(z_, raw_s[i], True)
        t = mlp(z_, raw_t[i], False)
        z = (1.0 - m) * (z - t) * jnp.exp(-s) + z_
        log_det = log_det - jnp.sum((1.0 - m) * s, axis=1)
    return z, log_det


# ----------------------------- main --------------------------------------------
if __name__ == "__main__":
    # RealNVP(n_blocks=2, input_size=4, hidden_size=32, n_hidden=1, 'Linear')
    B, D, H = 512, 4, 32          # batch sized so grid=(2,) with tile_b=256
    NB, NH = 2, 1
    TILE_B = 256

    key = jax.random.PRNGKey(0)
    k_x, k_p = jax.random.split(key)
    x = jax.random.normal(k_x, (B, D), jnp.float32)

    mask = build_mask(NB, D)                    # [NB, D]
    maskT = mask[:, :, None]                    # [NB, D, 1]  feature on sublanes
    raw_s, raw_t, fused = build_params(k_p, NB, NH, D, H)

    z, log_det_J = realnvp_forward(x, maskT, fused,
                                   n_blocks=NB, n_hidden=NH, tile_b=TILE_B)
    jax.block_until_ready((z, log_det_J))

    z_ref, ld_ref = realnvp_reference(x, mask, raw_s, raw_t, NB, NH)

    assert z.shape == (B, D) and log_det_J.shape == (B,)
    assert bool(jnp.all(jnp.isfinite(z))) and bool(jnp.all(jnp.isfinite(log_det_J)))
    assert bool(jnp.allclose(z, z_ref, atol=2e-2, rtol=2e-2)), \
        float(jnp.max(jnp.abs(z - z_ref)))
    assert bool(jnp.allclose(log_det_J, ld_ref, atol=2e-2, rtol=2e-2)), \
        float(jnp.max(jnp.abs(log_det_J - ld_ref)))
    print("KERNEL_OK")
</pallas_src>

<mosaic_0001>
module attributes {stable_mosaic.version = 11 : i64} {
  func.func @realnvp_kernel(%arg0: i32, %arg1: memref<4x256xf32, #tpu.memory_space<vmem>>, %arg2: memref<2x4x1xf32, #tpu.memory_space<vmem>>, %arg3: memref<2x64x4xf32, #tpu.memory_space<vmem>>, %arg4: memref<2x64x1xf32, #tpu.memory_space<vmem>>, %arg5: memref<2x1x64x64xf32, #tpu.memory_space<vmem>>, %arg6: memref<2x1x64x1xf32, #tpu.memory_space<vmem>>, %arg7: memref<2x8x64xf32, #tpu.memory_space<vmem>>, %arg8: memref<2x8x1xf32, #tpu.memory_space<vmem>>, %arg9: memref<5x256xf32, #tpu.memory_space<vmem>>) attributes {dimension_semantics = [#tpu.dimension_semantics<parallel>], iteration_bounds = array<i64: 2>, scalar_prefetch = 0 : i64, scratch_operands = 0 : i64, tpu.core_type = #tpu.core_type<tc>, window_params = [{transform_indices = @transform_0, window_bounds = array<i64: 4, 256>}, {pipeline_mode = #tpu.pipeline_mode<synchronous>, transform_indices = @transform_1, window_bounds = array<i64: 2, 4, 1>}, {pipeline_mode = #tpu.pipeline_mode<synchronous>, transform_indices = @transform_2, window_bounds = array<i64: 2, 64, 4>}, {pipeline_mode = #tpu.pipeline_mode<synchronous>, transform_indices = @transform_3, window_bounds = array<i64: 2, 64, 1>}, {pipeline_mode = #tpu.pipeline_mode<synchronous>, transform_indices = @transform_4, window_bounds = array<i64: 2, 1, 64, 64>}, {pipeline_mode = #tpu.pipeline_mode<synchronous>, transform_indices = @transform_5, window_bounds = array<i64: 2, 1, 64, 1>}, {pipeline_mode = #tpu.pipeline_mode<synchronous>, transform_indices = @transform_6, window_bounds = array<i64: 2, 8, 64>}, {pipeline_mode = #tpu.pipeline_mode<synchronous>, transform_indices = @transform_7, window_bounds = array<i64: 2, 8, 1>}, {transform_indices = @transform_8, window_bounds = array<i64: 5, 256>}]} {
    %c0 = arith.constant 0 : index
    %c0_0 = arith.constant 0 : index
    %0 = vector.load %arg1[%c0, %c0_0] : memref<4x256xf32, #tpu.memory_space<vmem>>, vector<4x256xf32>
    %cst = arith.constant 0.000000e+00 : f32
    %1 = vector.broadcast %cst : f32 to vector<1x256xf32>
    %c1 = arith.constant 1 : index
    %c0_1 = arith.constant 0 : index
    %c0_2 = arith.constant 0 : index
    %2 = vector.load %arg2[%c1, %c0_1, %c0_2] : memref<2x4x1xf32, #tpu.memory_space<vmem>>, vector<1x4x1xf32>
    %3 = vector.shape_cast %2 : vector<1x4x1xf32> to vector<4x1xf32>
    %cst_3 = arith.constant 1.000000e+00 : f32
    %4 = vector.broadcast %cst_3 : f32 to vector<4x1xf32>
    %5 = arith.subf %4, %3 : vector<4x1xf32>
    %6 = vector.broadcast %3 : vector<4x1xf32> to vector<4x256xf32>
    %7 = arith.mulf %6, %0 : vector<4x256xf32>
    %c1_4 = arith.constant 1 : index
    %c0_5 = arith.constant 0 : index
    %c0_6 = arith.constant 0 : index
    %8 = vector.load %arg3[%c1_4, %c0_5, %c0_6] : memref<2x64x4xf32, #tpu.memory_space<vmem>>, vector<1x64x4xf32>
    %9 = vector.shape_cast %8 : vector<1x64x4xf32> to vector<64x4xf32>
    %cst_7 = arith.constant dense<0.000000e+00> : vector<64x256xf32>
    %10 = tpu.matmul %9, %7, %cst_7 {dimension_numbers = #tpu.dot_dimension_numbers<[1], [0], [0], [1], [0, 0, 1, 1], [], []>} : vector<64x4xf32>, vector<4x256xf32>, vector<64x256xf32> -> vector<64x256xf32>
    %c1_8 = arith.constant 1 : index
    %c0_9 = arith.constant 0 : index
    %c0_10 = arith.constant 0 : index
    %11 = vector.load %arg4[%c1_8, %c0_9, %c0_10] : memref<2x64x1xf32, #tpu.memory_space<vmem>>, vector<1x64x1xf32>
    %12 = vector.shape_cast %11 : vector<1x64x1xf32> to vector<64x1xf32>
    %13 = vector.broadcast %12 : vector<64x1xf32> to vector<64x256xf32>
    %14 = arith.addf %10, %13 : vector<64x256xf32>
    %cst_11 = arith.constant 0.000000e+00 : f32
    %15 = vector.broadcast %cst_11 : f32 to vector<64x256xf32>
    %16 = arith.cmpf ogt, %14, %15 : vector<64x256xf32>
    %cst_12 = arith.constant 0.00999999977 : f32
    %17 = vector.broadcast %cst_12 : f32 to vector<64x256xf32>
    %18 = arith.mulf %17, %14 : vector<64x256xf32>
    %19 = arith.select %16, %14, %18 : vector<64x256xi1>, vector<64x256xf32>
    %c1_13 = arith.constant 1 : index
    %c0_14 = arith.constant 0 : index
    %c0_15 = arith.constant 0 : index
    %c0_16 = arith.constant 0 : index
    %20 = vector.load %arg5[%c1_13, %c0_14, %c0_15, %c0_16] : memref<2x1x64x64xf32, #tpu.memory_space<vmem>>, vector<1x1x64x64xf32>
    %21 = vector.shape_cast %20 : vector<1x1x64x64xf32> to vector<64x64xf32>
    %cst_17 = arith.constant dense<0.000000e+00> : vector<64x256xf32>
    %22 = tpu.matmul %21, %19, %cst_17 {dimension_numbers = #tpu.dot_dimension_numbers<[1], [0], [0], [1], [0, 0, 1, 1], [], []>} : vector<64x64xf32>, vector<64x256xf32>, vector<64x256xf32> -> vector<64x256xf32>
    %c1_18 = arith.constant 1 : index
    %c0_19 = arith.constant 0 : index
    %c0_20 = arith.constant 0 : index
    %c0_21 = arith.constant 0 : index
    %23 = vector.load %arg6[%c1_18, %c0_19, %c0_20, %c0_21] : memref<2x1x64x1xf32, #tpu.memory_space<vmem>>, vector<1x1x64x1xf32>
    %24 = vector.shape_cast %23 : vector<1x1x64x1xf32> to vector<64x1xf32>
    %25 = vector.broadcast %24 : vector<64x1xf32> to vector<64x256xf32>
    %26 = arith.addf %22, %25 : vector<64x256xf32>
    %cst_22 = arith.constant 0.000000e+00 : f32
    %27 = vector.broadcast %cst_22 : f32 to vector<64x256xf32>
    %28 = arith.cmpf ogt, %26, %27 : vector<64x256xf32>
    %cst_23 = arith.constant 0.00999999977 : f32
    %29 = vector.broadcast %cst_23 : f32 to vector<64x256xf32>
    %30 = arith.mulf %29, %26 : vector<64x256xf32>
    %31 = arith.select %28, %26, %30 : vector<64x256xi1>, vector<64x256xf32>
    %c1_24 = arith.constant 1 : index
    %c0_25 = arith.constant 0 : index
    %c0_26 = arith.constant 0 : index
    %32 = vector.load %arg7[%c1_24, %c0_25, %c0_26] : memref<2x8x64xf32, #tpu.memory_space<vmem>>, vector<1x8x64xf32>
    %33 = vector.shape_cast %32 : vector<1x8x64xf32> to vector<8x64xf32>
    %cst_27 = arith.constant dense<0.000000e+00> : vector<8x256xf32>
    %34 = tpu.matmul %33, %31, %cst_27 {dimension_numbers = #tpu.dot_dimension_numbers<[1], [0], [0], [1], [0, 0, 1, 1], [], []>} : vector<8x64xf32>, vector<64x256xf32>, vector<8x256xf32> -> vector<8x256xf32>
    %c1_28 = arith.constant 1 : index
    %c0_29 = arith.constant 0 : index
    %c0_30 = arith.constant 0 : index
    %35 = vector.load %arg8[%c1_28, %c0_29, %c0_30] : memref<2x8x1xf32, #tpu.memory_space<vmem>>, vector<1x8x1xf32>
    %36 = vector.shape_cast %35 : vector<1x8x1xf32> to vector<8x1xf32>
    %37 = vector.broadcast %36 : vector<8x1xf32> to vector<8x256xf32>
    %38 = arith.addf %34, %37 : vector<8x256xf32>
    %39 = vector.extract_strided_slice %38 {offsets = [0, 0], sizes = [4, 256], strides = [1, 1]} : vector<8x256xf32> to vector<4x256xf32>
    %40 = math.tanh %39 : vector<4x256xf32>
    %41 = vector.extract_strided_slice %38 {offsets = [4, 0], sizes = [4, 256], strides = [1, 1]} : vector<8x256xf32> to vector<4x256xf32>
    %42 = arith.subf %0, %41 : vector<4x256xf32>
    %43 = vector.broadcast %5 : vector<4x1xf32> to vector<4x256xf32>
    %44 = arith.mulf %43, %42 : vector<4x256xf32>
    %cst_31 = arith.constant 0.000000e+00 : f32
    %45 = vector.broadcast %cst_31 : f32 to vector<4x256xf32>
    %46 = arith.subf %45, %40 : vector<4x256xf32>
    %47 = math.exp %46 : vector<4x256xf32>
    %48 = arith.mulf %44, %47 : vector<4x256xf32>
    %49 = arith.addf %48, %7 : vector<4x256xf32>
    %50 = vector.broadcast %5 : vector<4x1xf32> to vector<4x256xf32>
    %51 = arith.mulf %50, %40 : vector<4x256xf32>
    %cst_32 = arith.constant dense<0.000000e+00> : vector<256xf32>
    %52 = vector.multi_reduction <add>, %51, %cst_32 [0] : vector<4x256xf32> to vector<256xf32>
    %53 = vector.shape_cast %52 : vector<256xf32> to vector<1x256xf32>
    %54 = arith.subf %1, %53 : vector<1x256xf32>
    %c0_33 = arith.constant 0 : index
    %c0_34 = arith.constant 0 : index
    %c0_35 = arith.constant 0 : index
    %55 = vector.load %arg2[%c0_33, %c0_34, %c0_35] : memref<2x4x1xf32, #tpu.memory_space<vmem>>, vector<1x4x1xf32>
    %56 = vector.shape_cast %55 : vector<1x4x1xf32> to vector<4x1xf32>
    %cst_36 = arith.constant 1.000000e+00 : f32
    %57 = vector.broadcast %cst_36 : f32 to vector<4x1xf32>
    %58 = arith.subf %57, %56 : vector<4x1xf32>
    %59 = vector.broadcast %56 : vector<4x1xf32> to vector<4x256xf32>
    %60 = arith.mulf %59, %49 : vector<4x256xf32>
    %c0_37 = arith.constant 0 : index
    %c0_38 = arith.constant 0 : index
    %c0_39 = arith.constant 0 : index
    %61 = vector.load %arg3[%c0_37, %c0_38, %c0_39] : memref<2x64x4xf32, #tpu.memory_space<vmem>>, vector<1x64x4xf32>
    %62 = vector.shape_cast %61 : vector<1x64x4xf32> to vector<64x4xf32>
    %cst_40 = arith.constant dense<0.000000e+00> : vector<64x256xf32>
    %63 = tpu.matmul %62, %60, %cst_40 {dimension_numbers = #tpu.dot_dimension_numbers<[1], [0], [0], [1], [0, 0, 1, 1], [], []>} : vector<64x4xf32>, vector<4x256xf32>, vector<64x256xf32> -> vector<64x256xf32>
    %c0_41 = arith.constant 0 : index
    %c0_42 = arith.constant 0 : index
    %c0_43 = arith.constant 0 : index
    %64 = vector.load %arg4[%c0_41, %c0_42, %c0_43] : memref<2x64x1xf32, #tpu.memory_space<vmem>>, vector<1x64x1xf32>
    %65 = vector.shape_cast %64 : vector<1x64x1xf32> to vector<64x1xf32>
    %66 = vector.broadcast %65 : vector<64x1xf32> to vector<64x256xf32>
    %67 = arith.addf %63, %66 : vector<64x256xf32>
    %cst_44 = arith.constant 0.000000e+00 : f32
    %68 = vector.broadcast %cst_44 : f32 to vector<64x256xf32>
    %69 = arith.cmpf ogt, %67, %68 : vector<64x256xf32>
    %cst_45 = arith.constant 0.00999999977 : f32
    %70 = vector.broadcast %cst_45 : f32 to vector<64x256xf32>
    %71 = arith.mulf %70, %67 : vector<64x256xf32>
    %72 = arith.select %69, %67, %71 : vector<64x256xi1>, vector<64x256xf32>
    %c0_46 = arith.constant 0 : index
    %c0_47 = arith.constant 0 : index
    %c0_48 = arith.constant 0 : index
    %c0_49 = arith.constant 0 : index
    %73 = vector.load %arg5[%c0_46, %c0_47, %c0_48, %c0_49] : memref<2x1x64x64xf32, #tpu.memory_space<vmem>>, vector<1x1x64x64xf32>
    %74 = vector.shape_cast %73 : vector<1x1x64x64xf32> to vector<64x64xf32>
    %cst_50 = arith.constant dense<0.000000e+00> : vector<64x256xf32>
    %75 = tpu.matmul %74, %72, %cst_50 {dimension_numbers = #tpu.dot_dimension_numbers<[1], [0], [0], [1], [0, 0, 1, 1], [], []>} : vector<64x64xf32>, vector<64x256xf32>, vector<64x256xf32> -> vector<64x256xf32>
    %c0_51 = arith.constant 0 : index
    %c0_52 = arith.constant 0 : index
    %c0_53 = arith.constant 0 : index
    %c0_54 = arith.constant 0 : index
    %76 = vector.load %arg6[%c0_51, %c0_52, %c0_53, %c0_54] : memref<2x1x64x1xf32, #tpu.memory_space<vmem>>, vector<1x1x64x1xf32>
    %77 = vector.shape_cast %76 : vector<1x1x64x1xf32> to vector<64x1xf32>
    %78 = vector.broadcast %77 : vector<64x1xf32> to vector<64x256xf32>
    %79 = arith.addf %75, %78 : vector<64x256xf32>
    %cst_55 = arith.constant 0.000000e+00 : f32
    %80 = vector.broadcast %cst_55 : f32 to vector<64x256xf32>
    %81 = arith.cmpf ogt, %79, %80 : vector<64x256xf32>
    %cst_56 = arith.constant 0.00999999977 : f32
    %82 = vector.broadcast %cst_56 : f32 to vector<64x256xf32>
    %83 = arith.mulf %82, %79 : vector<64x256xf32>
    %84 = arith.select %81, %79, %83 : vector<64x256xi1>, vector<64x256xf32>
    %c0_57 = arith.constant 0 : index
    %c0_58 = arith.constant 0 : index
    %c0_59 = arith.constant 0 : index
    %85 = vector.load %arg7[%c0_57, %c0_58, %c0_59] : memref<2x8x64xf32, #tpu.memory_space<vmem>>, vector<1x8x64xf32>
    %86 = vector.shape_cast %85 : vector<1x8x64xf32> to vector<8x64xf32>
    %cst_60 = arith.constant dense<0.000000e+00> : vector<8x256xf32>
    %87 = tpu.matmul %86, %84, %cst_60 {dimension_numbers = #tpu.dot_dimension_numbers<[1], [0], [0], [1], [0, 0, 1, 1], [], []>} : vector<8x64xf32>, vector<64x256xf32>, vector<8x256xf32> -> vector<8x256xf32>
    %c0_61 = arith.constant 0 : index
    %c0_62 = arith.constant 0 : index
    %c0_63 = arith.constant 0 : index
    %88 = vector.load %arg8[%c0_61, %c0_62, %c0_63] : memref<2x8x1xf32, #tpu.memory_space<vmem>>, vector<1x8x1xf32>
    %89 = vector.shape_cast %88 : vector<1x8x1xf32> to vector<8x1xf32>
    %90 = vector.broadcast %89 : vector<8x1xf32> to vector<8x256xf32>
    %91 = arith.addf %87, %90 : vector<8x256xf32>
    %92 = vector.extract_strided_slice %91 {offsets = [0, 0], sizes = [4, 256], strides = [1, 1]} : vector<8x256xf32> to vector<4x256xf32>
    %93 = math.tanh %92 : vector<4x256xf32>
    %94 = vector.extract_strided_slice %91 {offsets = [4, 0], sizes = [4, 256], strides = [1, 1]} : vector<8x256xf32> to vector<4x256xf32>
    %95 = arith.subf %49, %94 : vector<4x256xf32>
    %96 = vector.broadcast %58 : vector<4x1xf32> to vector<4x256xf32>
    %97 = arith.mulf %96, %95 : vector<4x256xf32>
    %cst_64 = arith.constant 0.000000e+00 : f32
    %98 = vector.broadcast %cst_64 : f32 to vector<4x256xf32>
    %99 = arith.subf %98, %93 : vector<4x256xf32>
    %100 = math.exp %99 : vector<4x256xf32>
    %101 = arith.mulf %97, %100 : vector<4x256xf32>
    %102 = arith.addf %101, %60 : vector<4x256xf32>
    %103 = vector.broadcast %58 : vector<4x1xf32> to vector<4x256xf32>
    %104 = arith.mulf %103, %93 : vector<4x256xf32>
    %cst_65 = arith.constant dense<0.000000e+00> : vector<256xf32>
    %105 = vector.multi_reduction <add>, %104, %cst_65 [0] : vector<4x256xf32> to vector<256xf32>
    %106 = vector.shape_cast %105 : vector<256xf32> to vector<1x256xf32>
    %107 = arith.subf %54, %106 : vector<1x256xf32>
    %c0_66 = arith.constant 0 : index
    %c0_67 = arith.constant 0 : index
    %108 = vector.load %arg9[%c0_66, %c0_67] : memref<5x256xf32, #tpu.memory_space<vmem>>, vector<4x256xf32>
    tpu.vector_store %arg9[%c0_66, %c0_67], %102 {strides = array<i32>} : memref<5x256xf32, #tpu.memory_space<vmem>>, vector<4x256xf32>,
    %c4 = arith.constant 4 : index
    %c0_68 = arith.constant 0 : index
    %109 = vector.load %arg9[%c4, %c0_68] : memref<5x256xf32, #tpu.memory_space<vmem>>, vector<1x256xf32>
    tpu.vector_store %arg9[%c4, %c0_68], %107 {strides = array<i32>} : memref<5x256xf32, #tpu.memory_space<vmem>>, vector<1x256xf32>,
    return
  }
  func.func @transform_0(%arg0: i32) -> (i32, i32) {
    %c0_i32 = arith.constant 0 : i32
    %c0_i32_0 = arith.constant 0 : i32
    return %c0_i32, %arg0 : i32, i32
  }
  func.func @transform_1(%arg0: i32) -> (i32, i32, i32) {
    %c0_i32 = arith.constant 0 : i32
    %c0_i32_0 = arith.constant 0 : i32
    %c0_i32_1 = arith.constant 0 : i32
    %c0_i32_2 = arith.constant 0 : i32
    return %c0_i32, %c0_i32_0, %c0_i32_1 : i32, i32, i32
  }
  func.func @transform_2(%arg0: i32) -> (i32, i32, i32) {
    %c0_i32 = arith.constant 0 : i32
    %c0_i32_0 = arith.constant 0 : i32
    %c0_i32_1 = arith.constant 0 : i32
    %c0_i32_2 = arith.constant 0 : i32
    return %c0_i32, %c0_i32_0, %c0_i32_1 : i32, i32, i32
  }
  func.func @transform_3(%arg0: i32) -> (i32, i32, i32) {
    %c0_i32 = arith.constant 0 : i32
    %c0_i32_0 = arith.constant 0 : i32
    %c0_i32_1 = arith.constant 0 : i32
    %c0_i32_2 = arith.constant 0 : i32
    return %c0_i32, %c0_i32_0, %c0_i32_1 : i32, i32, i32
  }
  func.func @transform_4(%arg0: i32) -> (i32, i32, i32, i32) {
    %c0_i32 = arith.constant 0 : i32
    %c0_i32_0 = arith.constant 0 : i32
    %c0_i32_1 = arith.constant 0 : i32
    %c0_i32_2 = arith.constant 0 : i32
    %c0_i32_3 = arith.constant 0 : i32
    return %c0_i32, %c0_i32_0, %c0_i32_1, %c0_i32_2 : i32, i32, i32, i32
  }
  func.func @transform_5(%arg0: i32) -> (i32, i32, i32, i32) {
    %c0_i32 = arith.constant 0 : i32
    %c0_i32_0 = arith.constant 0 : i32
    %c0_i32_1 = arith.constant 0 : i32
    %c0_i32_2 = arith.constant 0 : i32
    %c0_i32_3 = arith.constant 0 : i32
    return %c0_i32, %c0_i32_0, %c0_i32_1, %c0_i32_2 : i32, i32, i32, i32
  }
  func.func @transform_6(%arg0: i32) -> (i32, i32, i32) {
    %c0_i32 = arith.constant 0 : i32
    %c0_i32_0 = arith.constant 0 : i32
    %c0_i32_1 = arith.constant 0 : i32
    %c0_i32_2 = arith.constant 0 : i32
    return %c0_i32, %c0_i32_0, %c0_i32_1 : i32, i32, i32
  }
  func.func @transform_7(%arg0: i32) -> (i32, i32, i32) {
    %c0_i32 = arith.constant 0 : i32
    %c0_i32_0 = arith.constant 0 : i32
    %c0_i32_1 = arith.constant 0 : i32
    %c0_i32_2 = arith.constant 0 : i32
    return %c0_i32, %c0_i32_0, %c0_i32_1 : i32, i32, i32
  }
  func.func @transform_8(%arg0: i32) -> (i32, i32) {
    %c0_i32 = arith.constant 0 : i32
    %c0_i32_0 = arith.constant 0 : i32
    return %c0_i32, %arg0 : i32, i32
  }
}

</mosaic_0001>

<llo_original>
// kernel: tpu_custom_call.1
$region0: #{tpu_custom_call.1}
  #allocation0 [shape = 'u32[]', space=smem, size = 0x4, offset = 0x4, fixed_abs, tag = 'smem constant byte address 0x4 - core index']
  #allocation1 [shape = 'u32[72,128]{1,0:T(1,128)}', space=vmem, size = 0x9000, scoped, tag = 'internal scratch']
  %s0 = inlined_call_operand.vmem [shape: f32[4,512], index: 0, kind: input, shape index: {}]
  %s1 = inlined_call_operand.vmem [shape: f32[2,4,1], index: 1, kind: input, shape index: {}]
  %s2 = inlined_call_operand.vmem [shape: f32[2,64,4], index: 2, kind: input, shape index: {}]
  %s3 = inlined_call_operand.vmem [shape: f32[2,64,1], index: 3, kind: input, shape index: {}]
  %s4 = inlined_call_operand.vmem [shape: f32[2,1,64,64], index: 4, kind: input, shape index: {}]
  %s5 = inlined_call_operand.vmem [shape: f32[2,1,64,1], index: 5, kind: input, shape index: {}]
  %s6 = inlined_call_operand.vmem [shape: f32[2,8,64], index: 6, kind: input, shape index: {}]
  %s7 = inlined_call_operand.vmem [shape: f32[2,8,1], index: 7, kind: input, shape index: {}]
  %s8 = inlined_call_operand.hbm [shape: f32[5,512], index: 8, kind: output, shape index: {}]
  %s9 = sld [smem:[#allocation0]]
  $region65: #{tpu_custom_call.1} parent=0
    _
  %s11 = ssub.s32 1, %s9
  %s12 = scalar_select 0, %s11, %s9
  $region1: #{tpu_custom_call.1} parent=0
    #allocation2 [shape = 'u8[16384]{0}', space=vmem, size = 0x4000, scoped, tag = 'output window, operand 0']
    #allocation3 [shape = 's32[2]{0}', space=sflag, size = 0x8, scoped, tag = 'scoped memory for tpu_custom_call.1']
    %13 = vsyncpa [#allocation3], 0
    %s14 = scalar_lea.sflag [#allocation3], 1
    %15 = vsyncpa %s14, 0
    loop: start=0, step=1, limit=4
    $region2: #{tpu_custom_call.1} parent=1 // loop_pre_header
      _
    $region3: #{tpu_custom_call.1} parent=1 // loop_header
      %s17 = sphi 0, %s21
      %p18 = scmp.ge.s32.totalorder %s17, 4
      %s27 = sphi 0, %s29
      %s30 = sphi 0, %s27
      %s31 = sphi 0, %s30
      %s47 = sphi 0, %s31
      %s51 = sphi 0, %s51
      %s53 = sphi 0, %s51
      %s54 = sphi 0, %s53
      %s68 = sphi 0, %s54
      %s72 = sphi 0, %s72
      %s74 = sphi 0, %s72
      %s75 = sphi 0, %s74
      %s89 = sphi 0, %s75
      %s93 = sphi 0, %s93
      %s95 = sphi 0, %s93
      %s96 = sphi 0, %s95
      %s110 = sphi 0, %s96
      %s114 = sphi 0, %s114
      %s116 = sphi 0, %s114
      %s117 = sphi 0, %s116
      %s131 = sphi 0, %s117
      %s135 = sphi 0, %s135
      %s137 = sphi 0, %s135
      %s138 = sphi 0, %s137
      %s152 = sphi 0, %s138
      %s156 = sphi 0, %s156
      %s158 = sphi 0, %s156
      %s159 = sphi 0, %s158
      %s173 = sphi 0, %s159
      %s177 = sphi 0, %s177
      %s179 = sphi 0, %s177
      %s180 = sphi 0, %s179
      %s194 = sphi 0, %s180
      %s200 = sphi 0, %s202
      %s203 = sphi 0, %s200
      %s204 = sphi 0, %s203
      %s220 = sphi 0, %s204
    $region4: #{tpu_custom_call.1} parent=1 // loop_header_branch
      %20 = sbr.rel (%p18) target = $region8
    $region5: #{tpu_custom_call.1} parent=1 // loop_body
      %s22 = ssub.s32 %s17, 1
      %s23 = ssub.s32 %s17, 2
      %s24 = sadd.s32 %s17, 1
      %s25 = ssub.s32 %s17, %s24
      %p26 = scmp.eq.s32.totalorder %s25, 0
      %s28 = sadd.s32 %s27, 1
      %s29 = scalar_select %p26, %s27, %s28
      %p32 = pneg %p26
      %p33 = scmp.eq.s32.totalorder %s17, 1
      %p34 = por %p32, %p33
      %p35 = scmp.ne.s32.totalorder %s27, %s30
      %p36 = scmp.eq.s32.totalorder %s17, 0
      %p37 = por %p35, %p36
      %p38 = scmp.ne.s32.totalorder %s27, %s30
      %p39 = scmp.eq.s32.totalorder %s22, 1
      %p40 = por %p38, %p39
      %p41 = scmp.ne.s32.totalorder %s30, %s31
      %p42 = scmp.eq.s32.totalorder %s22, 0
      %p43 = por %p41, %p42
      %p44 = scmp.ne.s32.totalorder %s30, %s31
      %p45 = scmp.eq.s32.totalorder %s23, 1
      %p46 = por %p44, %p45
      %p48 = scmp.ne.s32.totalorder %s31, %s47
      %p49 = scmp.eq.s32.totalorder %s23, 0
      %p50 = por %p48, %p49
      %s52 = sadd.s32 %s51, 1
      %p55 = scmp.eq.s32.totalorder %s17, 1
      %p56 = scmp.ne.s32.totalorder %s51, %s53
      %p57 = scmp.eq.s32.totalorder %s17, 0
      %p58 = por %p56, %p57
      %p59 = scmp.ne.s32.totalorder %s51, %s53
      %p60 = scmp.eq.s32.totalorder %s22, 1
      %p61 = por %p59, %p60
      %p62 = scmp.ne.s32.totalorder %s53, %s54
      %p63 = scmp.eq.s32.totalorder %s22, 0
      %p64 = por %p62, %p63
      %p65 = scmp.ne.s32.totalorder %s53, %s54
      %p66 = scmp.eq.s32.totalorder %s23, 1
      %p67 = por %p65, %p66
      %p69 = scmp.ne.s32.totalorder %s54, %s68
      %p70 = scmp.eq.s32.totalorder %s23, 0
      %p71 = por %p69, %p70
      %s73 = sadd.s32 %s72, 1
      %p76 = scmp.eq.s32.totalorder %s17, 1
      %p77 = scmp.ne.s32.totalorder %s72, %s74
      %p78 = scmp.eq.s32.totalorder %s17, 0
      %p79 = por %p77, %p78
      %p80 = scmp.ne.s32.totalorder %s72, %s74
      %p81 = scmp.eq.s32.totalorder %s22, 1
      %p82 = por %p80, %p81
      %p83 = scmp.ne.s32.totalorder %s74, %s75
      %p84 = scmp.eq.s32.totalorder %s22, 0
      %p85 = por %p83, %p84
      %p86 = scmp.ne.s32.totalorder %s74, %s75
      %p87 = scmp.eq.s32.totalorder %s23, 1
      %p88 = por %p86, %p87
      %p90 = scmp.ne.s32.totalorder %s75, %s89
      %p91 = scmp.eq.s32.totalorder %s23, 0
      %p92 = por %p90, %p91
      %s94 = sadd.s32 %s93, 1
      %p97 = scmp.eq.s32.totalorder %s17, 1
      %p98 = scmp.ne.s32.totalorder %s93, %s95
      %p99 = scmp.eq.s32.totalorder %s17, 0
      %p100 = por %p98, %p99
      %p101 = scmp.ne.s32.totalorder %s93, %s95
      %p102 = scmp.eq.s32.totalorder %s22, 1
      %p103 = por %p101, %p102
      %p104 = scmp.ne.s32.totalorder %s95, %s96
      %p105 = scmp.eq.s32.totalorder %s22, 0
      %p106 = por %p104, %p105
      %p107 = scmp.ne.s32.totalorder %s95, %s96
      %p108 = scmp.eq.s32.totalorder %s23, 1
      %p109 = por %p107, %p108
      %p111 = scmp.ne.s32.totalorder %s96, %s110
      %p112 = scmp.eq.s32.totalorder %s23, 0
      %p113 = por %p111, %p112
      %s115 = sadd.s32 %s114, 1
      %p118 = scmp.eq.s32.totalorder %s17, 1
      %p119 = scmp.ne.s32.totalorder %s114, %s116
      %p120 = scmp.eq.s32.totalorder %s17, 0
      %p121 = por %p119, %p120
      %p122 = scmp.ne.s32.totalorder %s114, %s116
      %p123 = scmp.eq.s32.totalorder %s22, 1
      %p124 = por %p122, %p123
      %p125 = scmp.ne.s32.totalorder %s116, %s117
      %p126 = scmp.eq.s32.totalorder %s22, 0
      %p127 = por %p125, %p126
      %p128 = scmp.ne.s32.totalorder %s116, %s117
      %p129 = scmp.eq.s32.totalorder %s23, 1
      %p130 = por %p128, %p129
      %p132 = scmp.ne.s32.totalorder %s117, %s131
      %p133 = scmp.eq.s32.totalorder %s23, 0
      %p134 = por %p132, %p133
      %s136 = sadd.s32 %s135, 1
      %p139 = scmp.eq.s32.totalorder %s17, 1
      %p140 = scmp.ne.s32.totalorder %s135, %s137
      %p141 = scmp.eq.s32.totalorder %s17, 0
      %p142 = por %p140, %p141
      %p143 = scmp.ne.s32.totalorder %s135, %s137
      %p144 = scmp.eq.s32.totalorder %s22, 1
      %p145 = por %p143, %p144
      %p146 = scmp.ne.s32.totalorder %s137, %s138
      %p147 = scmp.eq.s32.totalorder %s22, 0
      %p148 = por %p146, %p147
      %p149 = scmp.ne.s32.totalorder %s137, %s138
      %p150 = scmp.eq.s32.totalorder %s23, 1
      %p151 = por %p149, %p150
      %p153 = scmp.ne.s32.totalorder %s138, %s152
      %p154 = scmp.eq.s32.totalorder %s23, 0
      %p155 = por %p153, %p154
      %s157 = sadd.s32 %s156, 1
      %p160 = scmp.eq.s32.totalorder %s17, 1
      %p161 = scmp.ne.s32.totalorder %s156, %s158
      %p162 = scmp.eq.s32.totalorder %s17, 0
      %p163 = por %p161, %p162
      %p164 = scmp.ne.s32.totalorder %s156, %s158
      %p165 = scmp.eq.s32.totalorder %s22, 1
      %p166 = por %p164, %p165
      %p167 = scmp.ne.s32.totalorder %s158, %s159
      %p168 = scmp.eq.s32.totalorder %s22, 0
      %p169 = por %p167, %p168
      %p170 = scmp.ne.s32.totalorder %s158, %s159
      %p171 = scmp.eq.s32.totalorder %s23, 1
      %p172 = por %p170, %p171
      %p174 = scmp.ne.s32.totalorder %s159, %s173
      %p175 = scmp.eq.s32.totalorder %s23, 0
      %p176 = por %p174, %p175
      %s178 = sadd.s32 %s177, 1
      %p181 = scmp.eq.s32.totalorder %s17, 1
      %p182 = scmp.ne.s32.totalorder %s177, %s179
      %p183 = scmp.eq.s32.totalorder %s17, 0
      %p184 = por %p182, %p183
      %p185 = scmp.ne.s32.totalorder %s177, %s179
      %p186 = scmp.eq.s32.totalorder %s22, 1
      %p187 = por %p185, %p186
      %p188 = scmp.ne.s32.totalorder %s179, %s180
      %p189 = scmp.eq.s32.totalorder %s22, 0
      %p190 = por %p188, %p189
      %p191 = scmp.ne.s32.totalorder %s179, %s180
      %p192 = scmp.eq.s32.totalorder %s23, 1
      %p193 = por %p191, %p192
      %p195 = scmp.ne.s32.totalorder %s180, %s194
      %p196 = scmp.eq.s32.totalorder %s23, 0
      %p197 = por %p195, %p196
      %s198 = ssub.s32 %s17, %s24
      %p199 = scmp.eq.s32.totalorder %s198, 0
      %s201 = sadd.s32 %s200, 1
      %s202 = scalar_select %p199, %s200, %s201
      %p205 = pneg %p199
      %p206 = scmp.eq.s32.totalorder %s17, 1
      %p207 = por %p205, %p206
      %p208 = scmp.ne.s32.totalorder %s200, %s203
      %p209 = scmp.eq.s32.totalorder %s17, 0
      %p210 = por %p208, %p209
      %p211 = scmp.ne.s32.totalorder %s200, %s203
      %p212 = scmp.eq.s32.totalorder %s22, 1
      %p213 = por %p211, %p212
      %p214 = scmp.ne.s32.totalorder %s203, %s204
      %p215 = scmp.eq.s32.totalorder %s22, 0
      %p216 = por %p214, %p215
      %p217 = scmp.ne.s32.totalorder %s203, %s204
      %p218 = scmp.eq.s32.totalorder %s23, 1
      %p219 = por %p217, %p218
      %p221 = scmp.ne.s32.totalorder %s204, %s220
      %p222 = scmp.eq.s32.totalorder %s23, 0
      %p223 = por %p221, %p222
      %p224 = scmp.le.s32.totalorder 1, %s17
      %p225 = scmp.lt.s32.totalorder %s17, 3
      %p226 = pnand %p224, %p225
      %p227 = pneg %p226
      // Predicated region
      $region9: #{tpu_custom_call.1} parent=5 // pred_check
        _
      $region10: #{tpu_custom_call.1} parent=5 // pred_check_branch
        %229 = sbr.rel (%p226) target = $region12
      $region11: #{tpu_custom_call.1} parent=5 // pred_region
        %s230 = ssub.s32 %s17, 1
        // Predicated region
        $region13: #{tpu_custom_call.1} parent=11 // pred_check
          %p231 = pneg %p64
        $region14: #{tpu_custom_call.1} parent=11 // pred_check_branch
          %233 = sbr.rel (%p231) target = $region16
        $region15: #{tpu_custom_call.1} parent=11 // pred_region
          _
        $region16: #{tpu_custom_call.1} parent=11 // pred_fallthru
          _
        // Predicated region
        $region17: #{tpu_custom_call.1} parent=11 // pred_check
          %p234 = pneg %p85
        $region18: #{tpu_custom_call.1} parent=11 // pred_check_branch
          %236 = sbr.rel (%p234) target = $region20
        $region19: #{tpu_custom_call.1} parent=11 // pred_region
          _
        $region20: #{tpu_custom_call.1} parent=11 // pred_fallthru
          _
        // Predicated region
        $region21: #{tpu_custom_call.1} parent=11 // pred_check
          %p237 = pneg %p106
        $region22: #{tpu_custom_call.1} parent=11 // pred_check_branch
          %239 = sbr.rel (%p237) target = $region24
        $region23: #{tpu_custom_call.1} parent=11 // pred_region
          _
        $region24: #{tpu_custom_call.1} parent=11 // pred_fallthru
          _
        // Predicated region
        $region25: #{tpu_custom_call.1} parent=11 // pred_check
          %p240 = pneg %p127
        $region26: #{tpu_custom_call.1} parent=11 // pred_check_branch
          %242 = sbr.rel (%p240) target = $region28
        $region27: #{tpu_custom_call.1} parent=11 // pred_region
          _
        $region28: #{tpu_custom_call.1} parent=11 // pred_fallthru
          _
        // Predicated region
        $region29: #{tpu_custom_call.1} parent=11 // pred_check
          %p243 = pneg %p148
        $region30: #{tpu_custom_call.1} parent=11 // pred_check_branch
          %245 = sbr.rel (%p243) target = $region32
        $region31: #{tpu_custom_call.1} parent=11 // pred_region
          _
        $region32: #{tpu_custom_call.1} parent=11 // pred_fallthru
          _
        // Predicated region
        $region33: #{tpu_custom_call.1} parent=11 // pred_check
          %p246 = pneg %p169
        $region34: #{tpu_custom_call.1} parent=11 // pred_check_branch
          %248 = sbr.rel (%p246) target = $region36
        $region35: #{tpu_custom_call.1} parent=11 // pred_region
          _
        $region36: #{tpu_custom_call.1} parent=11 // pred_fallthru
          _
        // Predicated region
        $region37: #{tpu_custom_call.1} parent=11 // pred_check
          %p249 = pneg %p190
        $region38: #{tpu_custom_call.1} parent=11 // pred_check_branch
          %251 = sbr.rel (%p249) target = $region40
        $region39: #{tpu_custom_call.1} parent=11 // pred_region
          _
        $region40: #{tpu_custom_call.1} parent=11 // pred_fallthru
          _
      $region12: #{tpu_custom_call.1} parent=5 // pred_fallthru
        _
      %p252 = scmp.lt.s32.totalorder %s17, 2
      // Predicated region
      $region41: #{tpu_custom_call.1} parent=5 // pred_check
        %p253 = pneg %p252
      $region42: #{tpu_custom_call.1} parent=5 // pred_check_branch
        %255 = sbr.rel (%p253) target = $region44
      $region43: #{tpu_custom_call.1} parent=5 // pred_region
        // Predicated region
        $region45: #{tpu_custom_call.1} parent=43 // pred_check
          %p256 = pneg %p37
        $region46: #{tpu_custom_call.1} parent=43 // pred_check_branch
          %258 = sbr.rel (%p256) target = $region48
        $region47: #{tpu_custom_call.1} parent=43 // pred_region
          %s259 = smul.u32 2, %s17
          %p260 = scmp.lt.s32.totalorder %s259, 3
          %s261 = scalar_select %p260, %s259, 3
          %s262 = smul.addr %s261, 4
          %s263 = scalar_lea.vmem %s0, %s262
          %s264 = smul.u32 2, %s17
        $region48: #{tpu_custom_call.1} parent=43 // pred_fallthru
          _
      $region44: #{tpu_custom_call.1} parent=5 // pred_fallthru
        _
      %p265 = scmp.le.s32.totalorder 1, %s17
      %p266 = scmp.lt.s32.totalorder %s17, 3
      %p267 = pnand %p265, %p266
      %p268 = pneg %p267
      // Predicated region
      $region49: #{tpu_custom_call.1} parent=5 // pred_check
        _
      $region50: #{tpu_custom_call.1} parent=5 // pred_check_branch
        %270 = sbr.rel (%p267) target = $region52
      $region51: #{tpu_custom_call.1} parent=5 // pred_region
        %s271 = ssub.s32 %s17, 1
        %s272 = smul.u32 2, %s22
        %p273 = scmp.lt.s32.totalorder %s272, 3
        %s274 = scalar_select %p273, %s272, 3
        %s275 = smul.addr %s274, 4
        %s276 = scalar_lea.vmem %s0, %s275
        %p277 = pneg %p43
        %p278 = pneg %p40
        %p279 = pneg %p64
        %p280 = pneg %p61
        %p281 = pneg %p85
        %p282 = pneg %p82
        %p283 = pneg %p106
        %p284 = pneg %p103
        %p285 = pneg %p127
        %p286 = pneg %p124
        %p287 = pneg %p148
        %p288 = pneg %p145
        %p289 = pneg %p169
        %p290 = pneg %p166
        %p291 = pneg %p190
        %p292 = pneg %p187
        %p293 = pneg %p216
        %p294 = pneg %p213
        %s295 = sand.u32 %s203, 1
        %s296 = scalar_lea.sflag [#allocation3], %s295
        %s297 = sand.u32 %s203, 1
        %s298 = smul.addr %s297, 16
        %s299 = scalar_lea.vmem [#allocation2], %s298
        %s300 = smul.u32 2, %s22
        %p301 = scmp.lt.s32.totalorder %s300, 3
        %s302 = scalar_select %p301, %s300, 3
        %s303 = smul.addr %s302, 4
        %s304 = scalar_lea.vmem %s0, %s303
        %s305 = smul.u32 2, %s22
        %s306 = smul.u32 2, %s22
        %v307 = vld [vmem:[%s304] sm:$0xff]
        %s308 = scalar_lea.vmem %s1, 4
        %v309 = vld [vmem:[%s308] sm:$0xf]
        %v310 = vsub.f32 1.0, %v309
        %312 = vset.pattern.permute.xlu0 0
        %313 = vperm.xlu0 %312, %v309
        %v314 = vpop.permute.xlu0 %313
        %317 = vst [vmem:[#allocation1] ss:$2 sm:$0xff] %v307
        %v318 = vld.sshfl [vmem:[#allocation1] sm:$0xff pattern:$0x75316420]
        %v319 = vld.sshfl [vmem:[#allocation1 + $0x8] sm:$0xff pattern:$0x75316420]
        %v322 = vmul.f32 %v314, %v318
        %v323 = vmul.f32 %v314, %v319
        %s324 = scalar_lea.vmem %s2, 64
        %v325 = vld [vmem:[%s324] sm:$0xff]
        %v326 = vld [vmem:[%s324 + $0x8] sm:$0xff]
        %v327 = vld [vmem:[%s324 + $0x10] sm:$0xff]
        %v328 = vld [vmem:[%s324 + $0x18] sm:$0xff]
        %v329 = vld [vmem:[%s324 + $0x20] sm:$0xff]
        %v330 = vld [vmem:[%s324 + $0x28] sm:$0xff]
        %v331 = vld [vmem:[%s324 + $0x30] sm:$0xff]
        %v332 = vld [vmem:[%s324 + $0x38] sm:$0xff]
        %s333 = scalar_lea.vmem %s3, 64
        %v334 = vld [vmem:[%s333] sm:$0xff]
        %v335 = vld [vmem:[%s333 + $0x8] sm:$0xff]
        %v336 = vld [vmem:[%s333 + $0x10] sm:$0xff]
        %v337 = vld [vmem:[%s333 + $0x18] sm:$0xff]
        %v338 = vld [vmem:[%s333 + $0x20] sm:$0xff]
        %v339 = vld [vmem:[%s333 + $0x28] sm:$0xff]
        %v340 = vld [vmem:[%s333 + $0x30] sm:$0xff]
        %v341 = vld [vmem:[%s333 + $0x38] sm:$0xff]
        %343 = vset.pattern.permute.xlu0 0
        %344 = vperm.xlu0 %343, %v334
        %v345 = vpop.permute.xlu0 %344
        %348 = vset.pattern.permute.xlu0 0
        %349 = vperm.xlu0 %348, %v335
        %v350 = vpop.permute.xlu0 %349
        %353 = vset.pattern.permute.xlu0 0
        %354 = vperm.xlu0 %353, %v336
        %v355 = vpop.permute.xlu0 %354
        %358 = vset.pattern.permute.xlu0 0
        %359 = vperm.xlu0 %358, %v337
        %v360 = vpop.permute.xlu0 %359
        %363 = vset.pattern.permute.xlu0 0
        %364 = vperm.xlu0 %363, %v338
        %v365 = vpop.permute.xlu0 %364
        %368 = vset.pattern.permute.xlu0 0
        %369 = vperm.xlu0 %368, %v339
        %v370 = vpop.permute.xlu0 %369
        %373 = vset.pattern.permute.xlu0 0
        %374 = vperm.xlu0 %373, %v340
        %v375 = vpop.permute.xlu0 %374
        %378 = vset.pattern.permute.xlu0 0
        %379 = vperm.xlu0 %378, %v341
        %v380 = vpop.permute.xlu0 %379
        %vm382 = vcmask 31744
        %v384 = vsel %vm382, %v325, 0
        %v387 = vsel %vm382, %v326, 0
        %v390 = vsel %vm382, %v327, 0
        %v393 = vsel %vm382, %v328, 0
        %v396 = vsel %vm382, %v329, 0
        %v399 = vsel %vm382, %v330, 0
        %v402 = vsel %vm382, %v331, 0
        %v405 = vsel %vm382, %v332, 0
        %vm407 = vcmask 1043456
        %v409 = vsel %vm407, %v322, 0
        %v412 = vsel %vm407, %v323, 0
        %414 = vmatpush.msra.mxu0 0.0
        %415 = vmatpush.msra.mxu0 0.0
        %416 = vmatpush.msra.mxu0 0.0
        %417 = vmatpush.msra.mxu0 0.0
        %418 = vmatpush.msra.mxu0 0.0
        %419 = vmatpush.msra.mxu0 0.0
        %420 = vmatpush.msra.mxu0 0.0
        %421 = vmatpush.msra.mxu0 0.0
        %422 = vmatpush.msra.mxu0 0.0
        %423 = vmatpush.msra.mxu0 0.0
        %424 = vmatpush.msra.mxu0 0.0
        %425 = vmatpush.msra.mxu0 0.0
        %426 = vmatpush.msra.mxu0 0.0
        %427 = vmatpush.msra.mxu0 0.0
        %428 = vmatpush.msra.mxu0 0.0
        %429 = vmatpush.msra.mxu0 %v409
        %430 = vmatmul.f32.gmra.mxu0 %v384
        %v431 = vpop.f32.mrf.mxu0
        %v432 = vadd.f32 %v345, %v431
        %433 = vmatmul.f32.gmra.mxu0 %v387
        %v434 = vpop.f32.mrf.mxu0
        %v435 = vadd.f32 %v350, %v434
        %436 = vmatmul.f32.gmra.mxu0 %v390
        %v437 = vpop.f32.mrf.mxu0
        %v438 = vadd.f32 %v355, %v437
        %439 = vmatmul.f32.gmra.mxu0 %v393
        %v440 = vpop.f32.mrf.mxu0
        %v441 = vadd.f32 %v360, %v440
        %442 = vmatmul.f32.gmra.mxu0 %v396
        %v443 = vpop.f32.mrf.mxu0
        %v444 = vadd.f32 %v365, %v443
        %445 = vmatmul.f32.gmra.mxu0 %v399
        %v446 = vpop.f32.mrf.mxu0
        %v447 = vadd.f32 %v370, %v446
        %448 = vmatmul.f32.gmra.mxu0 %v402
        %v449 = vpop.f32.mrf.mxu0
        %v450 = vadd.f32 %v375, %v449
        %451 = vmatmul.f32.gmra.mxu0 %v405
        %v452 = vpop.f32.mrf.mxu0
        %v453 = vadd.f32 %v380, %v452
        %454 = vdwg.mxu0
        %455 = vmatpush.msra.mxu0 0.0
        %456 = vmatpush.msra.mxu0 0.0
        %457 = vmatpush.msra.mxu0 0.0
        %458 = vmatpush.msra.mxu0 0.0
        %459 = vmatpush.msra.mxu0 0.0
        %460 = vmatpush.msra.mxu0 0.0
        %461 = vmatpush.msra.mxu0 0.0
        %462 = vmatpush.msra.mxu0 0.0
        %463 = vmatpush.msra.mxu0 0.0
        %464 = vmatpush.msra.mxu0 0.0
        %465 = vmatpush.msra.mxu0 0.0
        %466 = vmatpush.msra.mxu0 0.0
        %467 = vmatpush.msra.mxu0 0.0
        %468 = vmatpush.msra.mxu0 0.0
        %469 = vmatpush.msra.mxu0 0.0
        %470 = vmatpush.msra.mxu0 %v412
        %471 = vmatmul.f32.gmra.mxu0 %v384
        %v472 = vpop.f32.mrf.mxu0
        %v473 = vadd.f32 %v345, %v472
        %474 = vmatmul.f32.gmra.mxu0 %v387
        %v475 = vpop.f32.mrf.mxu0
        %v476 = vadd.f32 %v350, %v475
        %477 = vmatmul.f32.gmra.mxu0 %v390
        %v478 = vpop.f32.mrf.mxu0
        %v479 = vadd.f32 %v355, %v478
        %480 = vmatmul.f32.gmra.mxu0 %v393
        %v481 = vpop.f32.mrf.mxu0
        %v482 = vadd.f32 %v360, %v481
        %483 = vmatmul.f32.gmra.mxu0 %v396
        %v484 = vpop.f32.mrf.mxu0
        %v485 = vadd.f32 %v365, %v484
        %486 = vmatmul.f32.gmra.mxu0 %v399
        %v487 = vpop.f32.mrf.mxu0
        %v488 = vadd.f32 %v370, %v487
        %489 = vmatmul.f32.gmra.mxu0 %v402
        %v490 = vpop.f32.mrf.mxu0
        %v491 = vadd.f32 %v375, %v490
        %492 = vmatmul.f32.gmra.mxu0 %v405
        %v493 = vpop.f32.mrf.mxu0
        %v494 = vadd.f32 %v380, %v493
        %495 = vdwg.mxu0
        %vm496 = vcmp.gt.f32.partialorder %v432, 0.0
        %vm497 = vcmp.gt.f32.partialorder %v473, 0.0
        %vm498 = vcmp.gt.f32.partialorder %v435, 0.0
        %vm499 = vcmp.gt.f32.partialorder %v476, 0.0
        %vm500 = vcmp.gt.f32.partialorder %v438, 0.0
        %vm501 = vcmp.gt.f32.partialorder %v479, 0.0
        %vm502 = vcmp.gt.f32.partialorder %v441, 0.0
        %vm503 = vcmp.gt.f32.partialorder %v482, 0.0
        %vm504 = vcmp.gt.f32.partialorder %v444, 0.0
        %vm505 = vcmp.gt.f32.partialorder %v485, 0.0
        %vm506 = vcmp.gt.f32.partialorder %v447, 0.0
        %vm507 = vcmp.gt.f32.partialorder %v488, 0.0
        %vm508 = vcmp.gt.f32.partialorder %v450, 0.0
        %vm509 = vcmp.gt.f32.partialorder %v491, 0.0
        %vm510 = vcmp.gt.f32.partialorder %v453, 0.0
        %vm511 = vcmp.gt.f32.partialorder %v494, 0.0
        %v512 = vmul.f32 %v432, 0.01
        %v513 = vmul.f32 %v473, 0.01
        %v514 = vmul.f32 %v435, 0.01
        %v515 = vmul.f32 %v476, 0.01
        %v516 = vmul.f32 %v438, 0.01
        %v517 = vmul.f32 %v479, 0.01
        %v518 = vmul.f32 %v441, 0.01
        %v519 = vmul.f32 %v482, 0.01
        %v520 = vmul.f32 %v444, 0.01
        %v521 = vmul.f32 %v485, 0.01
        %v522 = vmul.f32 %v447, 0.01
        %v523 = vmul.f32 %v488, 0.01
        %v524 = vmul.f32 %v450, 0.01
        %v525 = vmul.f32 %v491, 0.01
        %v526 = vmul.f32 %v453, 0.01
        %v527 = vmul.f32 %v494, 0.01
        %v528 = vsel %vm496, %v432, %v512
        %v529 = vsel %vm497, %v473, %v513
        %v530 = vsel %vm498, %v435, %v514
        %v531 = vsel %vm499, %v476, %v515
        %v532 = vsel %vm500, %v438, %v516
        %v533 = vsel %vm501, %v479, %v517
        %v534 = vsel %vm502, %v441, %v518
        %v535 = vsel %vm503, %v482, %v519
        %v536 = vsel %vm504, %v444, %v520
        %v537 = vsel %vm505, %v485, %v521
        %v538 = vsel %vm506, %v447, %v522
        %v539 = vsel %vm507, %v488, %v523
        %v540 = vsel %vm508, %v450, %v524
        %v541 = vsel %vm509, %v491, %v525
        %v542 = vsel %vm510, %v453, %v526
        %v543 = vsel %vm511, %v494, %v527
        %s544 = scalar_lea.vmem %s4, 64
        %v545 = vld [vmem:[%s544] sm:$0xff]
        %v546 = vld [vmem:[%s544 + $0x8] sm:$0xff]
        %v547 = vld [vmem:[%s544 + $0x10] sm:$0xff]
        %v548 = vld [vmem:[%s544 + $0x18] sm:$0xff]
        %v549 = vld [vmem:[%s544 + $0x20] sm:$0xff]
        %v550 = vld [vmem:[%s544 + $0x28] sm:$0xff]
        %v551 = vld [vmem:[%s544 + $0x30] sm:$0xff]
        %v552 = vld [vmem:[%s544 + $0x38] sm:$0xff]
        %s553 = scalar_lea.vmem %s5, 64
        %v554 = vld [vmem:[%s553] sm:$0xff]
        %v555 = vld [vmem:[%s553 + $0x8] sm:$0xff]
        %v556 = vld [vmem:[%s553 + $0x10] sm:$0xff]
        %v557 = vld [vmem:[%s553 + $0x18] sm:$0xff]
        %v558 = vld [vmem:[%s553 + $0x20] sm:$0xff]
        %v559 = vld [vmem:[%s553 + $0x28] sm:$0xff]
        %v560 = vld [vmem:[%s553 + $0x30] sm:$0xff]
        %v561 = vld [vmem:[%s553 + $0x38] sm:$0xff]
        %563 = vset.pattern.permute.xlu0 0
        %564 = vperm.xlu0 %563, %v554
        %v565 = vpop.permute.xlu0 %564
        %568 = vset.pattern.permute.xlu0 0
        %569 = vperm.xlu0 %568, %v555
        %v570 = vpop.permute.xlu0 %569
        %573 = vset.pattern.permute.xlu0 0
        %574 = vperm.xlu0 %573, %v556
        %v575 = vpop.permute.xlu0 %574
        %578 = vset.pattern.permute.xlu0 0
        %579 = vperm.xlu0 %578, %v557
        %v580 = vpop.permute.xlu0 %579
        %583 = vset.pattern.permute.xlu0 0
        %584 = vperm.xlu0 %583, %v558
        %v585 = vpop.permute.xlu0 %584
        %588 = vset.pattern.permute.xlu0 0
        %589 = vperm.xlu0 %588, %v559
        %v590 = vpop.permute.xlu0 %589
        %593 = vset.pattern.permute.xlu0 0
        %594 = vperm.xlu0 %593, %v560
        %v595 = vpop.permute.xlu0 %594
        %598 = vset.pattern.permute.xlu0 0
        %599 = vperm.xlu0 %598, %v561
        %v600 = vpop.permute.xlu0 %599
        %vm602 = vcmask 523264
        %v604 = vsel %vm602, %v545, 0
        %v607 = vsel %vm602, %v546, 0
        %v610 = vsel %vm602, %v547, 0
        %v613 = vsel %vm602, %v548, 0
        %v616 = vsel %vm602, %v549, 0
        %v619 = vsel %vm602, %v550, 0
        %v622 = vsel %vm602, %v551, 0
        %v625 = vsel %vm602, %v552, 0
        %627 = vmatpush.msra.mxu0 0.0
        %628 = vmatpush.msra.mxu0 0.0
        %629 = vmatpush.msra.mxu0 0.0
        %630 = vmatpush.msra.mxu0 0.0
        %631 = vmatpush.msra.mxu0 0.0
        %632 = vmatpush.msra.mxu0 0.0
        %633 = vmatpush.msra.mxu0 0.0
        %634 = vmatpush.msra.mxu0 0.0
        %635 = vmatpush.msra.mxu0 %v542
        %636 = vmatpush.msra.mxu0 %v540
        %637 = vmatpush.msra.mxu0 %v538
        %638 = vmatpush.msra.mxu0 %v536
        %639 = vmatpush.msra.mxu0 %v534
        %640 = vmatpush.msra.mxu0 %v532
        %641 = vmatpush.msra.mxu0 %v530
        %642 = vmatpush.msra.mxu0 %v528
        %643 = vmatmul.f32.gmra.mxu0 %v604
        %v644 = vpop.f32.mrf.mxu0
        %v645 = vadd.f32 %v565, %v644
        %646 = vmatmul.f32.gmra.mxu0 %v607
        %v647 = vpop.f32.mrf.mxu0
        %v648 = vadd.f32 %v570, %v647
        %649 = vmatmul.f32.gmra.mxu0 %v610
        %v650 = vpop.f32.mrf.mxu0
        %v651 = vadd.f32 %v575, %v650
        %652 = vmatmul.f32.gmra.mxu0 %v613
        %v653 = vpop.f32.mrf.mxu0
        %v654 = vadd.f32 %v580, %v653
        %655 = vmatmul.f32.gmra.mxu0 %v616
        %v656 = vpop.f32.mrf.mxu0
        %v657 = vadd.f32 %v585, %v656
        %658 = vmatmul.f32.gmra.mxu0 %v619
        %v659 = vpop.f32.mrf.mxu0
        %v660 = vadd.f32 %v590, %v659
        %661 = vmatmul.f32.gmra.mxu0 %v622
        %v662 = vpop.f32.mrf.mxu0
        %v663 = vadd.f32 %v595, %v662
        %664 = vmatmul.f32.gmra.mxu0 %v625
        %v665 = vpop.f32.mrf.mxu0
        %v666 = vadd.f32 %v600, %v665
        %667 = vdwg.mxu0
        %668 = vmatpush.msra.mxu0 0.0
        %669 = vmatpush.msra.mxu0 0.0
        %670 = vmatpush.msra.mxu0 0.0
        %671 = vmatpush.msra.mxu0 0.0
        %672 = vmatpush.msra.mxu0 0.0
        %673 = vmatpush.msra.mxu0 0.0
        %674 = vmatpush.msra.mxu0 0.0
        %675 = vmatpush.msra.mxu0 0.0
        %676 = vmatpush.msra.mxu0 %v543
        %677 = vmatpush.msra.mxu0 %v541
        %678 = vmatpush.msra.mxu0 %v539
        %679 = vmatpush.msra.mxu0 %v537
        %680 = vmatpush.msra.mxu0 %v535
        %681 = vmatpush.msra.mxu0 %v533
        %682 = vmatpush.msra.mxu0 %v531
        %683 = vmatpush.msra.mxu0 %v529
        %684 = vmatmul.f32.gmra.mxu0 %v604
        %v685 = vpop.f32.mrf.mxu0
        %v686 = vadd.f32 %v565, %v685
        %687 = vmatmul.f32.gmra.mxu0 %v607
        %v688 = vpop.f32.mrf.mxu0
        %v689 = vadd.f32 %v570, %v688
        %690 = vmatmul.f32.gmra.mxu0 %v610
        %v691 = vpop.f32.mrf.mxu0
        %v692 = vadd.f32 %v575, %v691
        %693 = vmatmul.f32.gmra.mxu0 %v613
        %v694 = vpop.f32.mrf.mxu0
        %v695 = vadd.f32 %v580, %v694
        %696 = vmatmul.f32.gmra.mxu0 %v616
        %v697 = vpop.f32.mrf.mxu0
        %v698 = vadd.f32 %v585, %v697
        %699 = vmatmul.f32.gmra.mxu0 %v619
        %v700 = vpop.f32.mrf.mxu0
        %v701 = vadd.f32 %v590, %v700
        %702 = vmatmul.f32.gmra.mxu0 %v622
        %v703 = vpop.f32.mrf.mxu0
        %v704 = vadd.f32 %v595, %v703
        %705 = vmatmul.f32.gmra.mxu0 %v625
        %v706 = vpop.f32.mrf.mxu0
        %v707 = vadd.f32 %v600, %v706
        %708 = vdwg.mxu0
        %vm709 = vcmp.gt.f32.partialorder %v645, 0.0
        %vm710 = vcmp.gt.f32.partialorder %v686, 0.0
        %vm711 = vcmp.gt.f32.partialorder %v648, 0.0
        %vm712 = vcmp.gt.f32.partialorder %v689, 0.0
        %vm713 = vcmp.gt.f32.partialorder %v651, 0.0
        %vm714 = vcmp.gt.f32.partialorder %v692, 0.0
        %vm715 = vcmp.gt.f32.partialorder %v654, 0.0
        %vm716 = vcmp.gt.f32.partialorder %v695, 0.0
        %vm717 = vcmp.gt.f32.partialorder %v657, 0.0
        %vm718 = vcmp.gt.f32.partialorder %v698, 0.0
        %vm719 = vcmp.gt.f32.partialorder %v660, 0.0
        %vm720 = vcmp.gt.f32.partialorder %v701, 0.0
        %vm721 = vcmp.gt.f32.partialorder %v663, 0.0
        %vm722 = vcmp.gt.f32.partialorder %v704, 0.0
        %vm723 = vcmp.gt.f32.partialorder %v666, 0.0
        %vm724 = vcmp.gt.f32.partialorder %v707, 0.0
        %v725 = vmul.f32 %v645, 0.01
        %v726 = vmul.f32 %v686, 0.01
        %v727 = vmul.f32 %v648, 0.01
        %v728 = vmul.f32 %v689, 0.01
        %v729 = vmul.f32 %v651, 0.01
        %v730 = vmul.f32 %v692, 0.01
        %v731 = vmul.f32 %v654, 0.01
        %v732 = vmul.f32 %v695, 0.01
        %v733 = vmul.f32 %v657, 0.01
        %v734 = vmul.f32 %v698, 0.01
        %v735 = vmul.f32 %v660, 0.01
        %v736 = vmul.f32 %v701, 0.01
        %v737 = vmul.f32 %v663, 0.01
        %v738 = vmul.f32 %v704, 0.01
        %v739 = vmul.f32 %v666, 0.01
        %v740 = vmul.f32 %v707, 0.01
        %v741 = vsel %vm709, %v645, %v725
        %v742 = vsel %vm710, %v686, %v726
        %v743 = vsel %vm711, %v648, %v727
        %v744 = vsel %vm712, %v689, %v728
        %v745 = vsel %vm713, %v651, %v729
        %v746 = vsel %vm714, %v692, %v730
        %v747 = vsel %vm715, %v654, %v731
        %v748 = vsel %vm716, %v695, %v732
        %v749 = vsel %vm717, %v657, %v733
        %v750 = vsel %vm718, %v698, %v734
        %v751 = vsel %vm719, %v660, %v735
        %v752 = vsel %vm720, %v701, %v736
        %v753 = vsel %vm721, %v663, %v737
        %v754 = vsel %vm722, %v704, %v738
        %v755 = vsel %vm723, %v666, %v739
        %v756 = vsel %vm724, %v707, %v740
        %s757 = scalar_lea.vmem %s6, 8
        %v758 = vld [vmem:[%s757] sm:$0xff]
        %s759 = scalar_lea.vmem %s7, 8
        %v760 = vld [vmem:[%s759] sm:$0xff]
        %762 = vset.pattern.permute.xlu0 0
        %763 = vperm.xlu0 %762, %v760
        %v764 = vpop.permute.xlu0 %763
        %v767 = vsel %vm602, %v758, 0
        %769 = vmatpush.msra.mxu0 0.0
        %770 = vmatpush.msra.mxu0 0.0
        %771 = vmatpush.msra.mxu0 0.0
        %772 = vmatpush.msra.mxu0 0.0
        %773 = vmatpush.msra.mxu0 0.0
        %774 = vmatpush.msra.mxu0 0.0
        %775 = vmatpush.msra.mxu0 0.0
        %776 = vmatpush.msra.mxu0 0.0
        %777 = vmatpush.msra.mxu0 %v755
        %778 = vmatpush.msra.mxu0 %v753
        %779 = vmatpush.msra.mxu0 %v751
        %780 = vmatpush.msra.mxu0 %v749
        %781 = vmatpush.msra.mxu0 %v747
        %782 = vmatpush.msra.mxu0 %v745
        %783 = vmatpush.msra.mxu0 %v743
        %784 = vmatpush.msra.mxu0 %v741
        %785 = vmatmul.f32.gmra.mxu0 %v767
        %v786 = vpop.f32.mrf.mxu0
        %v787 = vadd.f32 %v764, %v786
        %788 = vdwg.mxu0
        %789 = vmatpush.msra.mxu0 0.0
        %790 = vmatpush.msra.mxu0 0.0
        %791 = vmatpush.msra.mxu0 0.0
        %792 = vmatpush.msra.mxu0 0.0
        %793 = vmatpush.msra.mxu0 0.0
        %794 = vmatpush.msra.mxu0 0.0
        %795 = vmatpush.msra.mxu0 0.0
        %796 = vmatpush.msra.mxu0 0.0
        %797 = vmatpush.msra.mxu0 %v756
        %798 = vmatpush.msra.mxu0 %v754
        %799 = vmatpush.msra.mxu0 %v752
        %800 = vmatpush.msra.mxu0 %v750
        %801 = vmatpush.msra.mxu0 %v748
        %802 = vmatpush.msra.mxu0 %v746
        %803 = vmatpush.msra.mxu0 %v744
        %804 = vmatpush.msra.mxu0 %v742
        %805 = vmatmul.f32.gmra.mxu0 %v767
        %v806 = vpop.f32.mrf.mxu0
        %v807 = vadd.f32 %v764, %v806
        %808 = vdwg.mxu0
        %v809 = vtanh.pop %v787
        %v810 = vtanh.pop %v807
        %813 = vst.sshfl [vmem:[#allocation1] sm:$0xff pattern:$0x75316420] %v787
        %814 = vst.sshfl [vmem:[#allocation1 + $0x8] sm:$0xff pattern:$0x75316420] %v807
        %s815 = scalar_lea.vmem [#allocation1], 1
        %v816 = vld [vmem:[%s815] ss:$2 sm:$0xff]
        %v818 = vsub.f32 %v307, %v816
        %820 = vset.pattern.permute.xlu0 0
        %821 = vperm.xlu0 %820, %v310
        %v822 = vpop.permute.xlu0 %821
        %825 = vst [vmem:[#allocation1] ss:$2 sm:$0xff] %v818
        %v826 = vld.sshfl [vmem:[#allocation1] sm:$0xff pattern:$0x75316420]
        %v827 = vld.sshfl [vmem:[#allocation1 + $0x8] sm:$0xff pattern:$0x75316420]
        %v830 = vmul.f32 %v822, %v826
        %v831 = vmul.f32 %v822, %v827
        %v832 = vsub.f32 0.0, %v809
        %v833 = vsub.f32 0.0, %v810
        %v834 = vmul.f32 %v832, 1.442695
        %v835 = vpow.pop %v834
        %v836 = vmul.f32 %v833, 1.442695
        %v837 = vpow.pop %v836
        %v838 = vmul.f32 %v830, %v835
        %v839 = vmul.f32 %v831, %v837
        %v840 = vadd.f32 %v838, %v322
        %v841 = vadd.f32 %v839, %v323
        %v842 = vmul.f32 %v822, %v809
        %v843 = vmul.f32 %v822, %v810
        %v844 = vsel %vm407, %v842, 0.0
        %v845 = vrot.slane %v844, 4
        %v846 = vadd.f32 %v844, %v845
        %v847 = vrot.slane %v846, 2
        %v848 = vadd.f32 %v846, %v847
        %v849 = vrot.slane %v848, 1
        %v850 = vadd.f32 %v848, %v849
        %v851 = vsel %vm407, %v843, 0.0
        %v852 = vrot.slane %v851, 4
        %v853 = vadd.f32 %v851, %v852
        %v854 = vrot.slane %v853, 2
        %v855 = vadd.f32 %v853, %v854
        %v856 = vrot.slane %v855, 1
        %v857 = vadd.f32 %v855, %v856
        %v858 = vsub.f32 0.0, %v850
        %v859 = vsub.f32 0.0, %v857
        %v860 = vld [vmem:[%s1] sm:$0xf]
        %v861 = vsub.f32 1.0, %v860
        %863 = vset.pattern.permute.xlu0 0
        %864 = vperm.xlu0 %863, %v860
        %v865 = vpop.permute.xlu0 %864
        %v867 = vmul.f32 %v865, %v840
        %v868 = vmul.f32 %v865, %v841
        %v869 = vld [vmem:[%s2] sm:$0xff]
        %v870 = vld [vmem:[%s2 + $0x8] sm:$0xff]
        %v871 = vld [vmem:[%s2 + $0x10] sm:$0xff]
        %v872 = vld [vmem:[%s2 + $0x18] sm:$0xff]
        %v873 = vld [vmem:[%s2 + $0x20] sm:$0xff]
        %v874 = vld [vmem:[%s2 + $0x28] sm:$0xff]
        %v875 = vld [vmem:[%s2 + $0x30] sm:$0xff]
        %v876 = vld [vmem:[%s2 + $0x38] sm:$0xff]
        %v877 = vld [vmem:[%s3] sm:$0xff]
        %v878 = vld [vmem:[%s3 + $0x8] sm:$0xff]
        %v879 = vld [vmem:[%s3 + $0x10] sm:$0xff]
        %v880 = vld [vmem:[%s3 + $0x18] sm:$0xff]
        %v881 = vld [vmem:[%s3 + $0x20] sm:$0xff]
        %v882 = vld [vmem:[%s3 + $0x28] sm:$0xff]
        %v883 = vld [vmem:[%s3 + $0x30] sm:$0xff]
        %v884 = vld [vmem:[%s3 + $0x38] sm:$0xff]
        %886 = vset.pattern.permute.xlu0 0
        %887 = vperm.xlu0 %886, %v877
        %v888 = vpop.permute.xlu0 %887
        %891 = vset.pattern.permute.xlu0 0
        %892 = vperm.xlu0 %891, %v878
        %v893 = vpop.permute.xlu0 %892
        %896 = vset.pattern.permute.xlu0 0
        %897 = vperm.xlu0 %896, %v879
        %v898 = vpop.permute.xlu0 %897
        %901 = vset.pattern.permute.xlu0 0
        %902 = vperm.xlu0 %901, %v880
        %v903 = vpop.permute.xlu0 %902
        %906 = vset.pattern.permute.xlu0 0
        %907 = vperm.xlu0 %906, %v881
        %v908 = vpop.permute.xlu0 %907
        %911 = vset.pattern.permute.xlu0 0
        %912 = vperm.xlu0 %911, %v882
        %v913 = vpop.permute.xlu0 %912
        %916 = vset.pattern.permute.xlu0 0
        %917 = vperm.xlu0 %916, %v883
        %v918 = vpop.permute.xlu0 %917
        %921 = vset.pattern.permute.xlu0 0
        %922 = vperm.xlu0 %921, %v884
        %v923 = vpop.permute.xlu0 %922
        %v926 = vsel %vm382, %v869, 0
        %v929 = vsel %vm382, %v870, 0
        %v932 = vsel %vm382, %v871, 0
        %v935 = vsel %vm382, %v872, 0
        %v938 = vsel %vm382, %v873, 0
        %v941 = vsel %vm382, %v874, 0
        %v944 = vsel %vm382, %v875, 0
        %v947 = vsel %vm382, %v876, 0
        %v950 = vsel %vm407, %v867, 0
        %v953 = vsel %vm407, %v868, 0
        %955 = vmatpush.msra.mxu0 0.0
        %956 = vmatpush.msra.mxu0 0.0
        %957 = vmatpush.msra.mxu0 0.0
        %958 = vmatpush.msra.mxu0 0.0
        %959 = vmatpush.msra.mxu0 0.0
        %960 = vmatpush.msra.mxu0 0.0
        %961 = vmatpush.msra.mxu0 0.0
        %962 = vmatpush.msra.mxu0 0.0
        %963 = vmatpush.msra.mxu0 0.0
        %964 = vmatpush.msra.mxu0 0.0
        %965 = vmatpush.msra.mxu0 0.0
        %966 = vmatpush.msra.mxu0 0.0
        %967 = vmatpush.msra.mxu0 0.0
        %968 = vmatpush.msra.mxu0 0.0
        %969 = vmatpush.msra.mxu0 0.0
        %970 = vmatpush.msra.mxu0 %v950
        %971 = vmatmul.f32.gmra.mxu0 %v926
        %v972 = vpop.f32.mrf.mxu0
        %v973 = vadd.f32 %v888, %v972
        %974 = vmatmul.f32.gmra.mxu0 %v929
        %v975 = vpop.f32.mrf.mxu0
        %v976 = vadd.f32 %v893, %v975
        %977 = vmatmul.f32.gmra.mxu0 %v932
        %v978 = vpop.f32.mrf.mxu0
        %v979 = vadd.f32 %v898, %v978
        %980 = vmatmul.f32.gmra.mxu0 %v935
        %v981 = vpop.f32.mrf.mxu0
        %v982 = vadd.f32 %v903, %v981
        %983 = vmatmul.f32.gmra.mxu0 %v938
        %v984 = vpop.f32.mrf.mxu0
        %v985 = vadd.f32 %v908, %v984
        %986 = vmatmul.f32.gmra.mxu0 %v941
        %v987 = vpop.f32.mrf.mxu0
        %v988 = vadd.f32 %v913, %v987
        %989 = vmatmul.f32.gmra.mxu0 %v944
        %v990 = vpop.f32.mrf.mxu0
        %v991 = vadd.f32 %v918, %v990
        %992 = vmatmul.f32.gmra.mxu0 %v947
        %v993 = vpop.f32.mrf.mxu0
        %v994 = vadd.f32 %v923, %v993
        %995 = vdwg.mxu0
        %996 = vmatpush.msra.mxu0 0.0
        %997 = vmatpush.msra.mxu0 0.0
        %998 = vmatpush.msra.mxu0 0.0
        %999 = vmatpush.msra.mxu0 0.0
        %1000 = vmatpush.msra.mxu0 0.0
        %1001 = vmatpush.msra.mxu0 0.0
        %1002 = vmatpush.msra.mxu0 0.0
        %1003 = vmatpush.msra.mxu0 0.0
        %1004 = vmatpush.msra.mxu0 0.0
        %1005 = vmatpush.msra.mxu0 0.0
        %1006 = vmatpush.msra.mxu0 0.0
        %1007 = vmatpush.msra.mxu0 0.0
        %1008 = vmatpush.msra.mxu0 0.0
        %1009 = vmatpush.msra.mxu0 0.0
        %1010 = vmatpush.msra.mxu0 0.0
        %1011 = vmatpush.msra.mxu0 %v953
        %1012 = vmatmul.f32.gmra.mxu0 %v926
        %v1013 = vpop.f32.mrf.mxu0
        %v1014 = vadd.f32 %v888, %v1013
        %1015 = vmatmul.f32.gmra.mxu0 %v929
        %v1016 = vpop.f32.mrf.mxu0
        %v1017 = vadd.f32 %v893, %v1016
        %1018 = vmatmul.f32.gmra.mxu0 %v932
        %v1019 = vpop.f32.mrf.mxu0
        %v1020 = vadd.f32 %v898, %v1019
        %1021 = vmatmul.f32.gmra.mxu0 %v935
        %v1022 = vpop.f32.mrf.mxu0
        %v1023 = vadd.f32 %v903, %v1022
        %1024 = vmatmul.f32.gmra.mxu0 %v938
        %v1025 = vpop.f32.mrf.mxu0
        %v1026 = vadd.f32 %v908, %v1025
        %1027 = vmatmul.f32.gmra.mxu0 %v941
        %v1028 = vpop.f32.mrf.mxu0
        %v1029 = vadd.f32 %v913, %v1028
        %1030 = vmatmul.f32.gmra.mxu0 %v944
        %v1031 = vpop.f32.mrf.mxu0
        %v1032 = vadd.f32 %v918, %v1031
        %1033 = vmatmul.f32.gmra.mxu0 %v947
        %v1034 = vpop.f32.mrf.mxu0
        %v1035 = vadd.f32 %v923, %v1034
        %1036 = vdwg.mxu0
        %vm1037 = vcmp.gt.f32.partialorder %v973, 0.0
        %vm1038 = vcmp.gt.f32.partialorder %v1014, 0.0
        %vm1039 = vcmp.gt.f32.partialorder %v976, 0.0
        %vm1040 = vcmp.gt.f32.partialorder %v1017, 0.0
        %vm1041 = vcmp.gt.f32.partialorder %v979, 0.0
        %vm1042 = vcmp.gt.f32.partialorder %v1020, 0.0
        %vm1043 = vcmp.gt.f32.partialorder %v982, 0.0
        %vm1044 = vcmp.gt.f32.partialorder %v1023, 0.0
        %vm1045 = vcmp.gt.f32.partialorder %v985, 0.0
        %vm1046 = vcmp.gt.f32.partialorder %v1026, 0.0
        %vm1047 = vcmp.gt.f32.partialorder %v988, 0.0
        %vm1048 = vcmp.gt.f32.partialorder %v1029, 0.0
        %vm1049 = vcmp.gt.f32.partialorder %v991, 0.0
        %vm1050 = vcmp.gt.f32.partialorder %v1032, 0.0
        %vm1051 = vcmp.gt.f32.partialorder %v994, 0.0
        %vm1052 = vcmp.gt.f32.partialorder %v1035, 0.0
        %v1053 = vmul.f32 %v973, 0.01
        %v1054 = vmul.f32 %v1014, 0.01
        %v1055 = vmul.f32 %v976, 0.01
        %v1056 = vmul.f32 %v1017, 0.01
        %v1057 = vmul.f32 %v979, 0.01
        %v1058 = vmul.f32 %v1020, 0.01
        %v1059 = vmul.f32 %v982, 0.01
        %v1060 = vmul.f32 %v1023, 0.01
        %v1061 = vmul.f32 %v985, 0.01
        %v1062 = vmul.f32 %v1026, 0.01
        %v1063 = vmul.f32 %v988, 0.01
        %v1064 = vmul.f32 %v1029, 0.01
        %v1065 = vmul.f32 %v991, 0.01
        %v1066 = vmul.f32 %v1032, 0.01
        %v1067 = vmul.f32 %v994, 0.01
        %v1068 = vmul.f32 %v1035, 0.01
        %v1069 = vsel %vm1037, %v973, %v1053
        %v1070 = vsel %vm1038, %v1014, %v1054
        %v1071 = vsel %vm1039, %v976, %v1055
        %v1072 = vsel %vm1040, %v1017, %v1056
        %v1073 = vsel %vm1041, %v979, %v1057
        %v1074 = vsel %vm1042, %v1020, %v1058
        %v1075 = vsel %vm1043, %v982, %v1059
        %v1076 = vsel %vm1044, %v1023, %v1060
        %v1077 = vsel %vm1045, %v985, %v1061
        %v1078 = vsel %vm1046, %v1026, %v1062
        %v1079 = vsel %vm1047, %v988, %v1063
        %v1080 = vsel %vm1048, %v1029, %v1064
        %v1081 = vsel %vm1049, %v991, %v1065
        %v1082 = vsel %vm1050, %v1032, %v1066
        %v1083 = vsel %vm1051, %v994, %v1067
        %v1084 = vsel %vm1052, %v1035, %v1068
        %v1085 = vld [vmem:[%s4] sm:$0xff]
        %v1086 = vld [vmem:[%s4 + $0x8] sm:$0xff]
        %v1087 = vld [vmem:[%s4 + $0x10] sm:$0xff]
        %v1088 = vld [vmem:[%s4 + $0x18] sm:$0xff]
        %v1089 = vld [vmem:[%s4 + $0x20] sm:$0xff]
        %v1090 = vld [vmem:[%s4 + $0x28] sm:$0xff]
        %v1091 = vld [vmem:[%s4 + $0x30] sm:$0xff]
        %v1092 = vld [vmem:[%s4 + $0x38] sm:$0xff]
        %v1093 = vld [vmem:[%s5] sm:$0xff]
        %v1094 = vld [vmem:[%s5 + $0x8] sm:$0xff]
        %v1095 = vld [vmem:[%s5 + $0x10] sm:$0xff]
        %v1096 = vld [vmem:[%s5 + $0x18] sm:$0xff]
        %v1097 = vld [vmem:[%s5 + $0x20] sm:$0xff]
        %v1098 = vld [vmem:[%s5 + $0x28] sm:$0xff]
        %v1099 = vld [vmem:[%s5 + $0x30] sm:$0xff]
        %v1100 = vld [vmem:[%s5 + $0x38] sm:$0xff]
        %1102 = vset.pattern.permute.xlu0 0
        %1103 = vperm.xlu0 %1102, %v1093
        %v1104 = vpop.permute.xlu0 %1103
        %1107 = vset.pattern.permute.xlu0 0
        %1108 = vperm.xlu0 %1107, %v1094
        %v1109 = vpop.permute.xlu0 %1108
        %1112 = vset.pattern.permute.xlu0 0
        %1113 = vperm.xlu0 %1112, %v1095
        %v1114 = vpop.permute.xlu0 %1113
        %1117 = vset.pattern.permute.xlu0 0
        %1118 = vperm.xlu0 %1117, %v1096
        %v1119 = vpop.permute.xlu0 %1118
        %1122 = vset.pattern.permute.xlu0 0
        %1123 = vperm.xlu0 %1122, %v1097
        %v1124 = vpop.permute.xlu0 %1123
        %1127 = vset.pattern.permute.xlu0 0
        %1128 = vperm.xlu0 %1127, %v1098
        %v1129 = vpop.permute.xlu0 %1128
        %1132 = vset.pattern.permute.xlu0 0
        %1133 = vperm.xlu0 %1132, %v1099
        %v1134 = vpop.permute.xlu0 %1133
        %1137 = vset.pattern.permute.xlu0 0
        %1138 = vperm.xlu0 %1137, %v1100
        %v1139 = vpop.permute.xlu0 %1138
        %v1142 = vsel %vm602, %v1085, 0
        %v1145 = vsel %vm602, %v1086, 0
        %v1148 = vsel %vm602, %v1087, 0
        %v1151 = vsel %vm602, %v1088, 0
        %v1154 = vsel %vm602, %v1089, 0
        %v1157 = vsel %vm602, %v1090, 0
        %v1160 = vsel %vm602, %v1091, 0
        %v1163 = vsel %vm602, %v1092, 0
        %1165 = vmatpush.msra.mxu0 0.0
        %1166 = vmatpush.msra.mxu0 0.0
        %1167 = vmatpush.msra.mxu0 0.0
        %1168 = vmatpush.msra.mxu0 0.0
        %1169 = vmatpush.msra.mxu0 0.0
        %1170 = vmatpush.msra.mxu0 0.0
        %1171 = vmatpush.msra.mxu0 0.0
        %1172 = vmatpush.msra.mxu0 0.0
        %1173 = vmatpush.msra.mxu0 %v1083
        %1174 = vmatpush.msra.mxu0 %v1081
        %1175 = vmatpush.msra.mxu0 %v1079
        %1176 = vmatpush.msra.mxu0 %v1077
        %1177 = vmatpush.msra.mxu0 %v1075
        %1178 = vmatpush.msra.mxu0 %v1073
        %1179 = vmatpush.msra.mxu0 %v1071
        %1180 = vmatpush.msra.mxu0 %v1069
        %1181 = vmatmul.f32.gmra.mxu0 %v1142
        %v1182 = vpop.f32.mrf.mxu0
        %v1183 = vadd.f32 %v1104, %v1182
        %1184 = vmatmul.f32.gmra.mxu0 %v1145
        %v1185 = vpop.f32.mrf.mxu0
        %v1186 = vadd.f32 %v1109, %v1185
        %1187 = vmatmul.f32.gmra.mxu0 %v1148
        %v1188 = vpop.f32.mrf.mxu0
        %v1189 = vadd.f32 %v1114, %v1188
        %1190 = vmatmul.f32.gmra.mxu0 %v1151
        %v1191 = vpop.f32.mrf.mxu0
        %v1192 = vadd.f32 %v1119, %v1191
        %1193 = vmatmul.f32.gmra.mxu0 %v1154
        %v1194 = vpop.f32.mrf.mxu0
        %v1195 = vadd.f32 %v1124, %v1194
        %1196 = vmatmul.f32.gmra.mxu0 %v1157
        %v1197 = vpop.f32.mrf.mxu0
        %v1198 = vadd.f32 %v1129, %v1197
        %1199 = vmatmul.f32.gmra.mxu0 %v1160
        %v1200 = vpop.f32.mrf.mxu0
        %v1201 = vadd.f32 %v1134, %v1200
        %1202 = vmatmul.f32.gmra.mxu0 %v1163
        %v1203 = vpop.f32.mrf.mxu0
        %v1204 = vadd.f32 %v1139, %v1203
        %1205 = vdwg.mxu0
        %1206 = vmatpush.msra.mxu0 0.0
        %1207 = vmatpush.msra.mxu0 0.0
        %1208 = vmatpush.msra.mxu0 0.0
        %1209 = vmatpush.msra.mxu0 0.0
        %1210 = vmatpush.msra.mxu0 0.0
        %1211 = vmatpush.msra.mxu0 0.0
        %1212 = vmatpush.msra.mxu0 0.0
        %1213 = vmatpush.msra.mxu0 0.0
        %1214 = vmatpush.msra.mxu0 %v1084
        %1215 = vmatpush.msra.mxu0 %v1082
        %1216 = vmatpush.msra.mxu0 %v1080
        %1217 = vmatpush.msra.mxu0 %v1078
        %1218 = vmatpush.msra.mxu0 %v1076
        %1219 = vmatpush.msra.mxu0 %v1074
        %1220 = vmatpush.msra.mxu0 %v1072
        %1221 = vmatpush.msra.mxu0 %v1070
        %1222 = vmatmul.f32.gmra.mxu0 %v1142
        %v1223 = vpop.f32.mrf.mxu0
        %v1224 = vadd.f32 %v1104, %v1223
        %1225 = vmatmul.f32.gmra.mxu0 %v1145
        %v1226 = vpop.f32.mrf.mxu0
        %v1227 = vadd.f32 %v1109, %v1226
        %1228 = vmatmul.f32.gmra.mxu0 %v1148
        %v1229 = vpop.f32.mrf.mxu0
        %v1230 = vadd.f32 %v1114, %v1229
        %1231 = vmatmul.f32.gmra.mxu0 %v1151
        %v1232 = vpop.f32.mrf.mxu0
        %v1233 = vadd.f32 %v1119, %v1232
        %1234 = vmatmul.f32.gmra.mxu0 %v1154
        %v1235 = vpop.f32.mrf.mxu0
        %v1236 = vadd.f32 %v1124, %v1235
        %1237 = vmatmul.f32.gmra.mxu0 %v1157
        %v1238 = vpop.f32.mrf.mxu0
        %v1239 = vadd.f32 %v1129, %v1238
        %1240 = vmatmul.f32.gmra.mxu0 %v1160
        %v1241 = vpop.f32.mrf.mxu0
        %v1242 = vadd.f32 %v1134, %v1241
        %1243 = vmatmul.f32.gmra.mxu0 %v1163
        %v1244 = vpop.f32.mrf.mxu0
        %v1245 = vadd.f32 %v1139, %v1244
        %1246 = vdwg.mxu0
        %vm1247 = vcmp.gt.f32.partialorder %v1183, 0.0
        %vm1248 = vcmp.gt.f32.partialorder %v1224, 0.0
        %vm1249 = vcmp.gt.f32.partialorder %v1186, 0.0
        %vm1250 = vcmp.gt.f32.partialorder %v1227, 0.0
        %vm1251 = vcmp.gt.f32.partialorder %v1189, 0.0
        %vm1252 = vcmp.gt.f32.partialorder %v1230, 0.0
        %vm1253 = vcmp.gt.f32.partialorder %v1192, 0.0
        %vm1254 = vcmp.gt.f32.partialorder %v1233, 0.0
        %vm1255 = vcmp.gt.f32.partialorder %v1195, 0.0
        %vm1256 = vcmp.gt.f32.partialorder %v1236, 0.0
        %vm1257 = vcmp.gt.f32.partialorder %v1198, 0.0
        %vm1258 = vcmp.gt.f32.partialorder %v1239, 0.0
        %vm1259 = vcmp.gt.f32.partialorder %v1201, 0.0
        %vm1260 = vcmp.gt.f32.partialorder %v1242, 0.0
        %vm1261 = vcmp.gt.f32.partialorder %v1204, 0.0
        %vm1262 = vcmp.gt.f32.partialorder %v1245, 0.0
        %v1263 = vmul.f32 %v1183, 0.01
        %v1264 = vmul.f32 %v1224, 0.01
        %v1265 = vmul.f32 %v1186, 0.01
        %v1266 = vmul.f32 %v1227, 0.01
        %v1267 = vmul.f32 %v1189, 0.01
        %v1268 = vmul.f32 %v1230, 0.01
        %v1269 = vmul.f32 %v1192, 0.01
        %v1270 = vmul.f32 %v1233, 0.01
        %v1271 = vmul.f32 %v1195, 0.01
        %v1272 = vmul.f32 %v1236, 0.01
        %v1273 = vmul.f32 %v1198, 0.01
        %v1274 = vmul.f32 %v1239, 0.01
        %v1275 = vmul.f32 %v1201, 0.01
        %v1276 = vmul.f32 %v1242, 0.01
        %v1277 = vmul.f32 %v1204, 0.01
        %v1278 = vmul.f32 %v1245, 0.01
        %v1279 = vsel %vm1247, %v1183, %v1263
        %v1280 = vsel %vm1248, %v1224, %v1264
        %v1281 = vsel %vm1249, %v1186, %v1265
        %v1282 = vsel %vm1250, %v1227, %v1266
        %v1283 = vsel %vm1251, %v1189, %v1267
        %v1284 = vsel %vm1252, %v1230, %v1268
        %v1285 = vsel %vm1253, %v1192, %v1269
        %v1286 = vsel %vm1254, %v1233, %v1270
        %v1287 = vsel %vm1255, %v1195, %v1271
        %v1288 = vsel %vm1256, %v1236, %v1272
        %v1289 = vsel %vm1257, %v1198, %v1273
        %v1290 = vsel %vm1258, %v1239, %v1274
        %v1291 = vsel %vm1259, %v1201, %v1275
        %v1292 = vsel %vm1260, %v1242, %v1276
        %v1293 = vsel %vm1261, %v1204, %v1277
        %v1294 = vsel %vm1262, %v1245, %v1278
        %v1295 = vld [vmem:[%s6] sm:$0xff]
        %v1296 = vld [vmem:[%s7] sm:$0xff]
        %1298 = vset.pattern.permute.xlu0 0
        %1299 = vperm.xlu0 %1298, %v1296
        %v1300 = vpop.permute.xlu0 %1299
        %v1303 = vsel %vm602, %v1295, 0
        %1305 = vmatpush.msra.mxu0 0.0
        %1306 = vmatpush.msra.mxu0 0.0
        %1307 = vmatpush.msra.mxu0 0.0
        %1308 = vmatpush.msra.mxu0 0.0
        %1309 = vmatpush.msra.mxu0 0.0
        %1310 = vmatpush.msra.mxu0 0.0
        %1311 = vmatpush.msra.mxu0 0.0
        %1312 = vmatpush.msra.mxu0 0.0
        %1313 = vmatpush.msra.mxu0 %v1293
        %1314 = vmatpush.msra.mxu0 %v1291
        %1315 = vmatpush.msra.mxu0 %v1289
        %1316 = vmatpush.msra.mxu0 %v1287
        %1317 = vmatpush.msra.mxu0 %v1285
        %1318 = vmatpush.msra.mxu0 %v1283
        %1319 = vmatpush.msra.mxu0 %v1281
        %1320 = vmatpush.msra.mxu0 %v1279
        %1321 = vmatmul.f32.gmra.mxu0 %v1303
        %v1322 = vpop.f32.mrf.mxu0
        %v1323 = vadd.f32 %v1300, %v1322
        %1324 = vdwg.mxu0
        %1325 = vmatpush.msra.mxu0 0.0
        %1326 = vmatpush.msra.mxu0 0.0
        %1327 = vmatpush.msra.mxu0 0.0
        %1328 = vmatpush.msra.mxu0 0.0
        %1329 = vmatpush.msra.mxu0 0.0
        %1330 = vmatpush.msra.mxu0 0.0
        %1331 = vmatpush.msra.mxu0 0.0
        %1332 = vmatpush.msra.mxu0 0.0
        %1333 = vmatpush.msra.mxu0 %v1294
        %1334 = vmatpush.msra.mxu0 %v1292
        %1335 = vmatpush.msra.mxu0 %v1290
        %1336 = vmatpush.msra.mxu0 %v1288
        %1337 = vmatpush.msra.mxu0 %v1286
        %1338 = vmatpush.msra.mxu0 %v1284
        %1339 = vmatpush.msra.mxu0 %v1282
        %1340 = vmatpush.msra.mxu0 %v1280
        %1341 = vmatmul.f32.gmra.mxu0 %v1303
        %v1342 = vpop.f32.mrf.mxu0
        %v1343 = vadd.f32 %v1300, %v1342
        %1344 = vdwg.mxu0
        %v1345 = vtanh.pop %v1323
        %v1346 = vtanh.pop %v1343
        %v1349 = vrot.slane %v1323, 4
        %v1350 = vrot.slane %v1343, 4
        %v1353 = vsub.f32 %v840, %v1349
        %v1354 = vsub.f32 %v841, %v1350
        %1356 = vset.pattern.permute.xlu0 0
        %1357 = vperm.xlu0 %1356, %v861
        %v1358 = vpop.permute.xlu0 %1357
        %v1360 = vmul.f32 %v1358, %v1353
        %v1361 = vmul.f32 %v1358, %v1354
        %v1362 = vsub.f32 0.0, %v1345
        %v1363 = vsub.f32 0.0, %v1346
        %v1364 = vmul.f32 %v1362, 1.442695
        %v1365 = vpow.pop %v1364
        %v1366 = vmul.f32 %v1363, 1.442695
        %v1367 = vpow.pop %v1366
        %v1368 = vmul.f32 %v1360, %v1365
        %v1369 = vmul.f32 %v1361, %v1367
        %v1370 = vadd.f32 %v1368, %v867
        %v1371 = vadd.f32 %v1369, %v868
        %v1372 = vmul.f32 %v1358, %v1345
        %v1373 = vmul.f32 %v1358, %v1346
        %v1374 = vsel %vm407, %v1372, 0.0
        %v1375 = vrot.slane %v1374, 4
        %v1376 = vadd.f32 %v1374, %v1375
        %v1377 = vrot.slane %v1376, 2
        %v1378 = vadd.f32 %v1376, %v1377
        %v1379 = vrot.slane %v1378, 1
        %v1380 = vadd.f32 %v1378, %v1379
        %v1381 = vsel %vm407, %v1373, 0.0
        %v1382 = vrot.slane %v1381, 4
        %v1383 = vadd.f32 %v1381, %v1382
        %v1384 = vrot.slane %v1383, 2
        %v1385 = vadd.f32 %v1383, %v1384
        %v1386 = vrot.slane %v1385, 1
        %v1387 = vadd.f32 %v1385, %v1386
        %v1388 = vsub.f32 %v858, %v1380
        %v1389 = vsub.f32 %v859, %v1387
        %1390 = vst [vmem:[%s299] sm:$0xf] %v1370
        %1391 = vst [vmem:[%s299 + $0x8] sm:$0xf] %v1371
        %v1394 = vrot.slane %v1389, 7
        %vm1395 = vcmask 1040384
        %v1396 = vsel %vm1395, %v1388, %v1394
        %v1398 = vlaneseq
        %vm1399 = vcmp.ge.s32.totalorder %v1398, 0
        %vm1400 = vcmp.lt.s32.totalorder %v1398, 256
        %vm1401 = vmand %vm1399, %vm1400
        %s1402 = scalar_lea.vmem %s299, 4 [#allocation2]
        %1403 = vst.msk [vmem:[%s1402] ss:$8 sm:$0x3] %vm1401, %v1396
        %1404 = vst.msk [vmem:[%s1402] ss:$8 sm:$0x0] %vm1401, %v1396
        %s1405 = sand.u32 %s203, 1
        %s1406 = scalar_lea.sflag [#allocation3], %s1405
        %s1407 = sand.u32 %s203, 1
        %s1408 = smul.addr %s1407, 16
        %s1409 = scalar_lea.vmem [#allocation2], %s1408
        // Predicated region
        $region53: #{tpu_custom_call.1} parent=51 // pred_check
          %p1410 = pneg %p213
        $region54: #{tpu_custom_call.1} parent=51 // pred_check_branch
          %1412 = sbr.rel (%p1410) target = $region56
        $region55: #{tpu_custom_call.1} parent=51 // pred_region
          %s1413 = smul.u32 2, %s22
          %1415 = vsyncadd %s1406, 0
          %s1416 = smul.addr %s1413, 8
          %s1417 = scalar_lea.hbm %s8, %s1416
          %s1419 = sshll.u32 %s1409, 4
          %s1420 = int_to_ptr.vmem [resolvable:$true] %s1419
          %s1421 = sshll.u32 %s1417, 4
          %s1422 = int_to_ptr.hbm [resolvable:$true] %s1421
          %1424 = dma.vmem_to_hbm [thread:$0]  %s1420, 256, %s1422, %s1406
        $region56: #{tpu_custom_call.1} parent=51 // pred_fallthru
          _
      $region52: #{tpu_custom_call.1} parent=5 // pred_fallthru
        _
      %p1425 = scmp.le.s32.totalorder 2, %s17
      // Predicated region
      $region57: #{tpu_custom_call.1} parent=5 // pred_check
        %p1426 = pneg %p1425
      $region58: #{tpu_custom_call.1} parent=5 // pred_check_branch
        %1428 = sbr.rel (%p1426) target = $region60
      $region59: #{tpu_custom_call.1} parent=5 // pred_region
        %s1429 = ssub.s32 %s17, 2
        // Predicated region
        $region61: #{tpu_custom_call.1} parent=59 // pred_check
          %p1430 = pneg %p219
        $region62: #{tpu_custom_call.1} parent=59 // pred_check_branch
          %1432 = sbr.rel (%p1430) target = $region64
        $region63: #{tpu_custom_call.1} parent=59 // pred_region
          %s1433 = sand.u32 %s204, 1
          %s1434 = scalar_lea.sflag [#allocation3], %s1433
          %s1435 = sand.u32 %s204, 1
          %s1436 = smul.addr %s1435, 16
          %s1437 = scalar_lea.vmem [#allocation2], %s1436
          %1439 = dma.done %s1434, 256
        $region64: #{tpu_custom_call.1} parent=59 // pred_fallthru
          _
      $region60: #{tpu_custom_call.1} parent=5 // pred_fallthru
        _
    $region6: #{tpu_custom_call.1} parent=1 // loop_footer
      %s21 = sadd.s32 1, %s17
    $region7: #{tpu_custom_call.1} parent=1 // loop_footer_branch
      %16 = sbr.rel target = $region3
    $region8: #{tpu_custom_call.1} parent=1 // loop_exit
      _
    %1440 = vsyncpa [#allocation3], 1
    %s1441 = scalar_lea.sflag [#allocation3], 1
    %1442 = vsyncpa %s1441, 1

</llo_original>
